<compile_context>
chip_gen: v7x
topology: tpu7x:2x2x1
jax: 0.10.0
libtpu: 0.0.40
codegen_flags: <defaults>
</compile_context>

<pallas_src>
import math
from functools import partial

import jax
import jax.numpy as jnp
from jax.experimental import pallas as pl
from jax.experimental.pallas import tpu as pltpu


def temporal_attention_kernel(
    x_ref,        # (M, S)          flat temporal_states block, M = batch_tile*T
    pos_ref,      # (T, H)          temporal encoding (broadcast in-kernel)
    wp_ref,       # (S, H)          state_projection weight
    bp_ref,       # (1, H)          state_projection bias
    wqkv_ref,     # (H, 3H)         fused [Wq/sqrt(dk) | Wk | Wv]
    wo_ref,       # (H, H)
    bo_ref,       # (1, H)
    ln_g_ref,     # (1, H)          layer_norm gamma
    ln_b_ref,     # (1, H)          layer_norm beta
    wout_ref,     # (H, S)          output_projection weight
    bout_ref,     # (1, S)          output_projection bias
    out_ref,      # (M, S)
    attn_ref,     # (batch_tile, nH, T, T)
    *,
    num_heads: int,
    time_steps: int,
    batch_tile: int,
):
    T = time_steps
    BT = batch_tile
    x = x_ref[...].astype(jnp.float32)                      # (M, S)

    # state_projection + bias, then temporal encoding broadcast across the
    # batch rows folded into M (no HBM-tiled pos copy).
    proj = jnp.dot(x, wp_ref[...], preferred_element_type=jnp.float32) + bp_ref[...]
    proj = proj + jnp.tile(pos_ref[...], (BT, 1))            # (M, H)

    # Fused Q/K/V projection: one N=3H MXU push; 1/sqrt(d_k) already folded
    # into the W_q columns -> no per-head scale below.
    qkv = jnp.dot(proj, wqkv_ref[...], preferred_element_type=jnp.float32)  # (M, 3H)

    H = proj.shape[-1]
    d_k = H // num_heads

    # Leading-dim split (T is a sublane multiple at the demo shapes): cheap.
    qkv3 = qkv.reshape(BT, T, 3 * H)                          # (BT, T, 3H)

    pv_heads = []
    for h in range(num_heads):                                # tiny static unroll
        c0 = h * d_k
        qh = qkv3[:, :, c0:c0 + d_k]                          # (BT, T, d_k)
        kh = qkv3[:, :, H + c0:H + c0 + d_k]                  # (BT, T, d_k)
        vh = qkv3[:, :, 2 * H + c0:2 * H + c0 + d_k]          # (BT, T, d_k)

        # Batched Q @ K^T for all batch rows at once (no explicit transpose).
        scores = jnp.einsum("btd,bsd->bts", qh, kh,
                            preferred_element_type=jnp.float32)   # (BT, T, T)

        # Numerically-stable softmax; EXACT division so attention rows sum to
        # 1 (these weights are a module output consumed downstream).
        m = jnp.max(scores, axis=-1, keepdims=True)
        e = jnp.exp(scores - m)
        denom = jnp.sum(e, axis=-1, keepdims=True)
        weights = e / denom                                   # (BT, T, T)

        attn_ref[:, h] = weights                              # one store per head

        pv_heads.append(jnp.einsum("bts,bsd->btd", weights, vh,
                                   preferred_element_type=jnp.float32))

    # Assemble the multi-head output in registers (one lane-axis concat),
    # then collapse back to (M, H) for the W_o matmul -- no VMEM scratch
    # round trip / masked sub-tile stores.
    attn_out = jnp.concatenate(pv_heads, axis=-1).reshape(BT * T, H)   # (M, H)

    # W_o projection (with bias) + residual + LayerNorm
    o = jnp.dot(attn_out, wo_ref[...], preferred_element_type=jnp.float32) + bo_ref[...]
    res = o + proj                                            # residual = projected query

    mean = jnp.mean(res, axis=-1, keepdims=True)
    var = jnp.mean((res - mean) ** 2, axis=-1, keepdims=True)
    ln = (res - mean) * jax.lax.rsqrt(var + 1e-5)
    ln = ln * ln_g_ref[...] + ln_b_ref[...]                   # (M, H)

    # output_projection back to state_dim
    final = jnp.dot(ln, wout_ref[...], preferred_element_type=jnp.float32) + bout_ref[...]
    out_ref[...] = final.astype(out_ref.dtype)


def _choose_batch_tile(B, T, target_rows=256):
    """Pick batch_tile so the grid has >=2 parallel steps (v7x megacore) when
    possible, while keeping M = batch_tile*T near `target_rows` MXU rows."""
    cap = max(1, target_rows // max(T, 1))
    divisors = [d for d in range(1, B + 1) if B % d == 0]
    capped = [d for d in divisors if d <= cap]
    best = max(capped) if capped else 1
    if B >= 2:
        ok = [d for d in capped if B // d >= 2]
        if ok:
            best = max(ok)
        else:
            multi = [d for d in divisors if B // d >= 2]
            if multi:
                best = max(multi)
    return best


def prepare_kernel_params(params, *, num_heads, time_steps):
    """One-time (setup) parameter plumbing: slice pos enc, fuse+scale QKV."""
    H = params["wp"].shape[1]
    d_k = H // num_heads
    kp = dict(params)
    kp["pos"] = params["pos_full"][:time_steps]                       # (T, H)
    kp["wqkv"] = jnp.concatenate(
        [params["wq"] * jnp.float32(1.0 / math.sqrt(d_k)),            # scale folded
         params["wk"], params["wv"]], axis=1)                         # (H, 3H)
    return kp


def temporal_attention_forward(x, kparams, *, num_heads, batch_tile=None):
    """x: [B, T, S] float32 -> (output [B, T, S], attn [B, nH, T, T])."""
    B, T, S = x.shape
    H = kparams["wp"].shape[1]
    d_k = H // num_heads

    if batch_tile is None:
        batch_tile = _choose_batch_tile(B, T)
    # The x/out block's second-minor dim must be a multiple of 8 unless it
    # equals the full array extent; fall back to the full batch otherwise.
    if (batch_tile * T) % 8 != 0 and batch_tile != B:
        batch_tile = B
    assert B % batch_tile == 0
    n_tiles = B // batch_tile
    M = batch_tile * T                       # matmul M rows per grid step

    x_flat = x.reshape(B * T, S)

    kernel = partial(
        temporal_attention_kernel,
        num_heads=num_heads,
        time_steps=T,
        batch_tile=batch_tile,
    )

    # weights / broadcast inputs: same (full) block every grid step
    wspec = lambda shape: pl.BlockSpec(shape, lambda i: (0, 0))

    out_shape = (
        jax.ShapeDtypeStruct((B * T, S), jnp.float32),
        jax.ShapeDtypeStruct((B, num_heads, T, T), jnp.float32),
    )

    flops = 2 * B * T * (S * H + 3 * H * H + 2 * num_heads * T * d_k + H * H + H * S)
    transcendentals = B * num_heads * T * T
    bytes_accessed = 4 * (
        x_flat.size + kparams["pos"].size + kparams["wqkv"].size
        + kparams["wp"].size + kparams["bp"].size
        + kparams["wo"].size + kparams["bo"].size
        + kparams["ln_g"].size + kparams["ln_b"].size
        + kparams["wout"].size + kparams["bout"].size
        + B * T * S + B * num_heads * T * T
    )

    # Explicit VMEM budget (re-derived per shapes; stays within v7x's 64 MiB).
    weight_bytes = 4 * (
        kparams["pos"].size + kparams["wqkv"].size + kparams["wp"].size
        + kparams["bp"].size + kparams["wo"].size + kparams["bo"].size
        + kparams["ln_g"].size + kparams["ln_b"].size
        + kparams["wout"].size + kparams["bout"].size
    )
    tile_bytes = 4 * (2 * M * S + 2 * M * S + 2 * batch_tile * num_heads * T * T
                      + M * 4 * H)            # live activation slabs (proj/qkv/etc.)
    vmem_limit = int(min(64 * 1024 * 1024,
                         max(8 * 1024 * 1024, 8 * (2 * weight_bytes + tile_bytes))))

    out_flat, attn = pl.pallas_call(
        kernel,
        out_shape=out_shape,
        grid_spec=pltpu.PrefetchScalarGridSpec(
            num_scalar_prefetch=0,
            grid=(n_tiles,),
            in_specs=[
                pl.BlockSpec((M, S), lambda i: (i, 0)),              # x (flat)
                wspec((T, H)),                                       # pos enc (T, H)
                wspec((S, H)),                                       # Wp
                wspec((1, H)),                                       # bp
                wspec((H, 3 * H)),                                   # Wqkv (fused, scaled)
                wspec((H, H)),                                       # Wo
                wspec((1, H)),                                       # bo
                wspec((1, H)),                                       # ln gamma
                wspec((1, H)),                                       # ln beta
                wspec((H, S)),                                       # Wout
                wspec((1, S)),                                       # bout
            ],
            out_specs=[
                pl.BlockSpec((M, S), lambda i: (i, 0)),
                pl.BlockSpec((batch_tile, num_heads, T, T), lambda i: (i, 0, 0, 0)),
            ],
        ),
        compiler_params=pltpu.CompilerParams(
            dimension_semantics=("parallel",),
            vmem_limit_bytes=vmem_limit,
        ),
        cost_estimate=pl.CostEstimate(
            flops=int(flops),
            transcendentals=int(transcendentals),
            bytes_accessed=int(bytes_accessed),
        ),
    )(
        x_flat,
        kparams["pos"],
        kparams["wp"], kparams["bp"],
        kparams["wqkv"],
        kparams["wo"], kparams["bo"],
        kparams["ln_g"], kparams["ln_b"],
        kparams["wout"], kparams["bout"],
    )

    return out_flat.reshape(B, T, S), attn


def init_params(key, state_dim, hidden_dim, max_len=100):
    """Deterministic synthetic init, mirroring the PyTorch module's shapes."""
    ks = jax.random.split(key, 10)

    def xavier(k, fan_in, fan_out):
        bound = math.sqrt(6.0 / (fan_in + fan_out))
        return jax.random.uniform(k, (fan_in, fan_out), jnp.float32, -bound, bound)

    def linear_w(k, fan_in, fan_out):
        bound = 1.0 / math.sqrt(fan_in)
        return jax.random.uniform(k, (fan_in, fan_out), jnp.float32, -bound, bound)

    def linear_b(k, fan_in, fan_out):
        bound = 1.0 / math.sqrt(fan_in)
        return jax.random.uniform(k, (1, fan_out), jnp.float32, -bound, bound)

    params = {
        # temporal_encoding: Parameter(randn(100, hidden_dim))
        "pos_full": jax.random.normal(ks[0], (max_len, hidden_dim), jnp.float32),
        # state_projection: Linear(state_dim, hidden_dim) with bias
        "wp": linear_w(ks[1], state_dim, hidden_dim),
        "bp": linear_b(ks[2], state_dim, hidden_dim),
        # MHA: W_q/W_k/W_v xavier, no bias; W_o xavier + default bias
        "wq": xavier(ks[3], hidden_dim, hidden_dim),
        "wk": xavier(ks[4], hidden_dim, hidden_dim),
        "wv": xavier(ks[5], hidden_dim, hidden_dim),
        "wo": xavier(ks[6], hidden_dim, hidden_dim),
        "bo": linear_b(ks[7], hidden_dim, hidden_dim),
        # LayerNorm defaults
        "ln_g": jnp.ones((1, hidden_dim), jnp.float32),
        "ln_b": jnp.zeros((1, hidden_dim), jnp.float32),
        # output_projection: Linear(hidden_dim, state_dim) with bias
        "wout": linear_w(ks[8], hidden_dim, state_dim),
        "bout": linear_b(ks[9], hidden_dim, state_dim),
    }
    return params


def reference_forward(x, params, *, num_heads):
    """Pure-JAX reference matching the PyTorch forward (eval mode)."""
    B, T, S = x.shape
    H = params["wp"].shape[1]
    d_k = H // num_heads

    with jax.default_matmul_precision("highest"):
        proj = x @ params["wp"] + params["bp"] + params["pos"][None]      # (B,T,H)
        q = proj @ params["wq"]
        k = proj @ params["wk"]
        v = proj @ params["wv"]

        def split(a):
            return a.reshape(B, T, num_heads, d_k).transpose(0, 2, 1, 3)   # (B,nH,T,dk)

        qh, kh, vh = split(q), split(k), split(v)
        scores = jnp.einsum("bhqd,bhkd->bhqk", qh, kh) / math.sqrt(d_k)
        weights = jax.nn.softmax(scores, axis=-1)
        attn = jnp.einsum("bhqk,bhkd->bhqd", weights, vh)
        attn = attn.transpose(0, 2, 1, 3).reshape(B, T, H)

        o = attn @ params["wo"] + params["bo"]
        res = o + proj
        mean = res.mean(-1, keepdims=True)
        var = ((res - mean) ** 2).mean(-1, keepdims=True)
        ln = (res - mean) / jnp.sqrt(var + 1e-5) * params["ln_g"] + params["ln_b"]
        out = ln @ params["wout"] + params["bout"]
    return out, weights


if __name__ == "__main__":
    # Small shapes consistent with TemporalAttention:
    #   temporal_states: [batch=2, time_steps=8, state_dim=4]
    #   hidden_dim=32, num_heads=2
    batch, time_steps, state_dim = 2, 8, 4
    hidden_dim, num_heads = 32, 2

    key = jax.random.PRNGKey(0)
    k_x, k_p = jax.random.split(key)

    x = jax.random.normal(k_x, (batch, time_steps, state_dim), jnp.float32)
    params = init_params(k_p, state_dim, hidden_dim)
    # setup-time plumbing: slice pos enc to T, fuse+scale QKV weight
    kparams = prepare_kernel_params(params, num_heads=num_heads, time_steps=time_steps)

    out, attn = temporal_attention_forward(x, kparams, num_heads=num_heads)
    out = jax.block_until_ready(out)
    attn = jax.block_until_ready(attn)

    ref_out, ref_attn = reference_forward(x, kparams, num_heads=num_heads)

    assert out.shape == (batch, time_steps, state_dim)
    assert attn.shape == (batch, num_heads, time_steps, time_steps)
    assert jnp.allclose(out, ref_out, atol=2e-3, rtol=2e-3)
    assert jnp.allclose(attn, ref_attn, atol=1e-3, rtol=1e-3)

    print("KERNEL_OK")
</pallas_src>

<mosaic_0001>
module attributes {stable_mosaic.version = 11 : i64} {
  func.func @temporal_attention_kernel(%arg0: i32, %arg1: memref<8x4xf32, #tpu.memory_space<vmem>>, %arg2: memref<8x32xf32, #tpu.memory_space<vmem>>, %arg3: memref<4x32xf32, #tpu.memory_space<vmem>>, %arg4: memref<1x32xf32, #tpu.memory_space<vmem>>, %arg5: memref<32x96xf32, #tpu.memory_space<vmem>>, %arg6: memref<32x32xf32, #tpu.memory_space<vmem>>, %arg7: memref<1x32xf32, #tpu.memory_space<vmem>>, %arg8: memref<1x32xf32, #tpu.memory_space<vmem>>, %arg9: memref<1x32xf32, #tpu.memory_space<vmem>>, %arg10: memref<32x4xf32, #tpu.memory_space<vmem>>, %arg11: memref<1x4xf32, #tpu.memory_space<vmem>>, %arg12: memref<8x4xf32, #tpu.memory_space<vmem>>, %arg13: memref<1x2x8x8xf32, #tpu.memory_space<vmem>>) attributes {dimension_semantics = [#tpu.dimension_semantics<parallel>], iteration_bounds = array<i64: 2>, scalar_prefetch = 0 : i64, scratch_operands = 0 : i64, tpu.core_type = #tpu.core_type<tc>, window_params = [{transform_indices = @transform_0, window_bounds = array<i64: 8, 4>}, {pipeline_mode = #tpu.pipeline_mode<synchronous>, transform_indices = @transform_1, window_bounds = array<i64: 8, 32>}, {pipeline_mode = #tpu.pipeline_mode<synchronous>, transform_indices = @transform_2, window_bounds = array<i64: 4, 32>}, {pipeline_mode = #tpu.pipeline_mode<synchronous>, transform_indices = @transform_3, window_bounds = array<i64: 1, 32>}, {pipeline_mode = #tpu.pipeline_mode<synchronous>, transform_indices = @transform_4, window_bounds = array<i64: 32, 96>}, {pipeline_mode = #tpu.pipeline_mode<synchronous>, transform_indices = @transform_5, window_bounds = array<i64: 32, 32>}, {pipeline_mode = #tpu.pipeline_mode<synchronous>, transform_indices = @transform_6, window_bounds = array<i64: 1, 32>}, {pipeline_mode = #tpu.pipeline_mode<synchronous>, transform_indices = @transform_7, window_bounds = array<i64: 1, 32>}, {pipeline_mode = #tpu.pipeline_mode<synchronous>, transform_indices = @transform_8, window_bounds = array<i64: 1, 32>}, {pipeline_mode = #tpu.pipeline_mode<synchronous>, transform_indices = @transform_9, window_bounds = array<i64: 32, 4>}, {pipeline_mode = #tpu.pipeline_mode<synchronous>, transform_indices = @transform_10, window_bounds = array<i64: 1, 4>}, {transform_indices = @transform_11, window_bounds = array<i64: 8, 4>}, {transform_indices = @transform_12, window_bounds = array<i64: 1, 2, 8, 8>}]} {
    %c0 = arith.constant 0 : index
    %c0_0 = arith.constant 0 : index
    %0 = vector.load %arg1[%c0, %c0_0] : memref<8x4xf32, #tpu.memory_space<vmem>>, vector<8x4xf32>
    %c0_1 = arith.constant 0 : index
    %c0_2 = arith.constant 0 : index
    %1 = vector.load %arg3[%c0_1, %c0_2] : memref<4x32xf32, #tpu.memory_space<vmem>>, vector<4x32xf32>
    %cst = arith.constant dense<0.000000e+00> : vector<8x32xf32>
    %2 = tpu.matmul %0, %1, %cst {dimension_numbers = #tpu.dot_dimension_numbers<[1], [0], [0], [1], [0, 0, 1, 1], [], []>} : vector<8x4xf32>, vector<4x32xf32>, vector<8x32xf32> -> vector<8x32xf32>
    %c0_3 = arith.constant 0 : index
    %c0_4 = arith.constant 0 : index
    %3 = vector.load %arg4[%c0_3, %c0_4] : memref<1x32xf32, #tpu.memory_space<vmem>>, vector<1x32xf32>
    %4 = vector.broadcast %3 : vector<1x32xf32> to vector<8x32xf32>
    %5 = arith.addf %2, %4 : vector<8x32xf32>
    %c0_5 = arith.constant 0 : index
    %c0_6 = arith.constant 0 : index
    %6 = vector.load %arg2[%c0_5, %c0_6] : memref<8x32xf32, #tpu.memory_space<vmem>>, vector<8x32xf32>
    %7 = arith.addf %5, %6 : vector<8x32xf32>
    %c0_7 = arith.constant 0 : index
    %c0_8 = arith.constant 0 : index
    %8 = vector.load %arg5[%c0_7, %c0_8] : memref<32x96xf32, #tpu.memory_space<vmem>>, vector<32x96xf32>
    %cst_9 = arith.constant dense<0.000000e+00> : vector<8x96xf32>
    %9 = tpu.matmul %7, %8, %cst_9 {dimension_numbers = #tpu.dot_dimension_numbers<[1], [0], [0], [1], [0, 0, 1, 1], [], []>} : vector<8x32xf32>, vector<32x96xf32>, vector<8x96xf32> -> vector<8x96xf32>
    %10 = vector.shape_cast %9 : vector<8x96xf32> to vector<1x8x96xf32>
    %11 = vector.extract_strided_slice %10 {offsets = [0, 0, 0], sizes = [1, 8, 16], strides = [1, 1, 1]} : vector<1x8x96xf32> to vector<1x8x16xf32>
    %12 = vector.extract_strided_slice %10 {offsets = [0, 0, 32], sizes = [1, 8, 16], strides = [1, 1, 1]} : vector<1x8x96xf32> to vector<1x8x16xf32>
    %13 = vector.extract_strided_slice %10 {offsets = [0, 0, 64], sizes = [1, 8, 16], strides = [1, 1, 1]} : vector<1x8x96xf32> to vector<1x8x16xf32>
    "tpu.trace_start"() <{level = 10 : i32, message = "btd,bsd->bts"}> : () -> ()
    %cst_10 = arith.constant dense<0.000000e+00> : vector<1x8x8xf32>
    %14 = tpu.matmul %11, %12, %cst_10 {dimension_numbers = #tpu.dot_dimension_numbers<[2], [2], [1], [1], [0, 0, 0, 1, 1, 1], [0], [0]>} : vector<1x8x16xf32>, vector<1x8x16xf32>, vector<1x8x8xf32> -> vector<1x8x8xf32>
    "tpu.trace_stop"() : () -> ()
    %cst_11 = arith.constant dense<0xFF800000> : vector<1x8xf32>
    %15 = vector.multi_reduction <maximumf>, %14, %cst_11 [2] : vector<1x8x8xf32> to vector<1x8xf32>
    %16 = vector.shape_cast %15 : vector<1x8xf32> to vector<1x8x1xf32>
    %17 = vector.broadcast %16 : vector<1x8x1xf32> to vector<1x8x8xf32>
    %18 = arith.subf %14, %17 : vector<1x8x8xf32>
    %19 = math.exp %18 : vector<1x8x8xf32>
    %cst_12 = arith.constant dense<0.000000e+00> : vector<1x8xf32>
    %20 = vector.multi_reduction <add>, %19, %cst_12 [2] : vector<1x8x8xf32> to vector<1x8xf32>
    %21 = vector.shape_cast %20 : vector<1x8xf32> to vector<1x8x1xf32>
    %22 = vector.broadcast %21 : vector<1x8x1xf32> to vector<1x8x8xf32>
    %23 = arith.divf %19, %22 : vector<1x8x8xf32>
    %c0_13 = arith.constant 0 : index
    %c0_14 = arith.constant 0 : index
    %c0_15 = arith.constant 0 : index
    %c0_16 = arith.constant 0 : index
    %24 = vector.load %arg13[%c0_13, %c0_14, %c0_15, %c0_16] : memref<1x2x8x8xf32, #tpu.memory_space<vmem>>, vector<1x1x8x8xf32>
    %25 = vector.shape_cast %24 : vector<1x1x8x8xf32> to vector<1x8x8xf32>
    %26 = vector.shape_cast %23 : vector<1x8x8xf32> to vector<1x1x8x8xf32>
    tpu.vector_store %arg13[%c0_13, %c0_14, %c0_15, %c0_16], %26 {strides = array<i32>} : memref<1x2x8x8xf32, #tpu.memory_space<vmem>>, vector<1x1x8x8xf32>,
    "tpu.trace_start"() <{level = 10 : i32, message = "bts,bsd->btd"}> : () -> ()
    %cst_17 = arith.constant dense<0.000000e+00> : vector<1x8x16xf32>
    %27 = tpu.matmul %23, %13, %cst_17 {dimension_numbers = #tpu.dot_dimension_numbers<[2], [1], [1], [2], [0, 0, 0, 1, 1, 2], [0], [0]>} : vector<1x8x8xf32>, vector<1x8x16xf32>, vector<1x8x16xf32> -> vector<1x8x16xf32>
    "tpu.trace_stop"() : () -> ()
    %28 = vector.extract_strided_slice %10 {offsets = [0, 0, 16], sizes = [1, 8, 16], strides = [1, 1, 1]} : vector<1x8x96xf32> to vector<1x8x16xf32>
    %29 = vector.extract_strided_slice %10 {offsets = [0, 0, 48], sizes = [1, 8, 16], strides = [1, 1, 1]} : vector<1x8x96xf32> to vector<1x8x16xf32>
    %30 = vector.extract_strided_slice %10 {offsets = [0, 0, 80], sizes = [1, 8, 16], strides = [1, 1, 1]} : vector<1x8x96xf32> to vector<1x8x16xf32>
    "tpu.trace_start"() <{level = 10 : i32, message = "btd,bsd->bts"}> : () -> ()
    %cst_18 = arith.constant dense<0.000000e+00> : vector<1x8x8xf32>
    %31 = tpu.matmul %28, %29, %cst_18 {dimension_numbers = #tpu.dot_dimension_numbers<[2], [2], [1], [1], [0, 0, 0, 1, 1, 1], [0], [0]>} : vector<1x8x16xf32>, vector<1x8x16xf32>, vector<1x8x8xf32> -> vector<1x8x8xf32>
    "tpu.trace_stop"() : () -> ()
    %cst_19 = arith.constant dense<0xFF800000> : vector<1x8xf32>
    %32 = vector.multi_reduction <maximumf>, %31, %cst_19 [2] : vector<1x8x8xf32> to vector<1x8xf32>
    %33 = vector.shape_cast %32 : vector<1x8xf32> to vector<1x8x1xf32>
    %34 = vector.broadcast %33 : vector<1x8x1xf32> to vector<1x8x8xf32>
    %35 = arith.subf %31, %34 : vector<1x8x8xf32>
    %36 = math.exp %35 : vector<1x8x8xf32>
    %cst_20 = arith.constant dense<0.000000e+00> : vector<1x8xf32>
    %37 = vector.multi_reduction <add>, %36, %cst_20 [2] : vector<1x8x8xf32> to vector<1x8xf32>
    %38 = vector.shape_cast %37 : vector<1x8xf32> to vector<1x8x1xf32>
    %39 = vector.broadcast %38 : vector<1x8x1xf32> to vector<1x8x8xf32>
    %40 = arith.divf %36, %39 : vector<1x8x8xf32>
    %c0_21 = arith.constant 0 : index
    %c1 = arith.constant 1 : index
    %c0_22 = arith.constant 0 : index
    %c0_23 = arith.constant 0 : index
    %41 = vector.load %arg13[%c0_21, %c1, %c0_22, %c0_23] : memref<1x2x8x8xf32, #tpu.memory_space<vmem>>, vector<1x1x8x8xf32>
    %42 = vector.shape_cast %41 : vector<1x1x8x8xf32> to vector<1x8x8xf32>
    %43 = vector.shape_cast %40 : vector<1x8x8xf32> to vector<1x1x8x8xf32>
    tpu.vector_store %arg13[%c0_21, %c1, %c0_22, %c0_23], %43 {strides = array<i32>} : memref<1x2x8x8xf32, #tpu.memory_space<vmem>>, vector<1x1x8x8xf32>,
    "tpu.trace_start"() <{level = 10 : i32, message = "bts,bsd->btd"}> : () -> ()
    %cst_24 = arith.constant dense<0.000000e+00> : vector<1x8x16xf32>
    %44 = tpu.matmul %40, %30, %cst_24 {dimension_numbers = #tpu.dot_dimension_numbers<[2], [1], [1], [2], [0, 0, 0, 1, 1, 2], [0], [0]>} : vector<1x8x8xf32>, vector<1x8x16xf32>, vector<1x8x16xf32> -> vector<1x8x16xf32>
    "tpu.trace_stop"() : () -> ()
    %45 = tpu.concatenate %27, %44 in 2 : vector<1x8x16xf32>, vector<1x8x16xf32> -> vector<1x8x32xf32>
    %46 = vector.shape_cast %45 : vector<1x8x32xf32> to vector<8x32xf32>
    %c0_25 = arith.constant 0 : index
    %c0_26 = arith.constant 0 : index
    %47 = vector.load %arg6[%c0_25, %c0_26] : memref<32x32xf32, #tpu.memory_space<vmem>>, vector<32x32xf32>
    %cst_27 = arith.constant dense<0.000000e+00> : vector<8x32xf32>
    %48 = tpu.matmul %46, %47, %cst_27 {dimension_numbers = #tpu.dot_dimension_numbers<[1], [0], [0], [1], [0, 0, 1, 1], [], []>} : vector<8x32xf32>, vector<32x32xf32>, vector<8x32xf32> -> vector<8x32xf32>
    %c0_28 = arith.constant 0 : index
    %c0_29 = arith.constant 0 : index
    %49 = vector.load %arg7[%c0_28, %c0_29] : memref<1x32xf32, #tpu.memory_space<vmem>>, vector<1x32xf32>
    %50 = vector.broadcast %49 : vector<1x32xf32> to vector<8x32xf32>
    %51 = arith.addf %48, %50 : vector<8x32xf32>
    %52 = arith.addf %51, %7 : vector<8x32xf32>
    %cst_30 = arith.constant dense<0.000000e+00> : vector<8xf32>
    %53 = vector.multi_reduction <add>, %52, %cst_30 [1] : vector<8x32xf32> to vector<8xf32>
    %54 = vector.shape_cast %53 : vector<8xf32> to vector<8x1xf32>
    %cst_31 = arith.constant 3.200000e+01 : f32
    %55 = vector.broadcast %cst_31 : f32 to vector<8x1xf32>
    %56 = arith.divf %54, %55 : vector<8x1xf32>
    %57 = vector.broadcast %56 : vector<8x1xf32> to vector<8x32xf32>
    %58 = arith.subf %52, %57 : vector<8x32xf32>
    %59 = arith.mulf %58, %58 : vector<8x32xf32>
    %cst_32 = arith.constant dense<0.000000e+00> : vector<8xf32>
    %60 = vector.multi_reduction <add>, %59, %cst_32 [1] : vector<8x32xf32> to vector<8xf32>
    %61 = vector.shape_cast %60 : vector<8xf32> to vector<8x1xf32>
    %cst_33 = arith.constant 3.200000e+01 : f32
    %62 = vector.broadcast %cst_33 : f32 to vector<8x1xf32>
    %63 = arith.divf %61, %62 : vector<8x1xf32>
    %64 = vector.broadcast %56 : vector<8x1xf32> to vector<8x32xf32>
    %65 = arith.subf %52, %64 : vector<8x32xf32>
    %cst_34 = arith.constant 9.99999974E-6 : f32
    %66 = vector.broadcast %cst_34 : f32 to vector<8x1xf32>
    %67 = arith.addf %63, %66 : vector<8x1xf32>
    %68 = math.rsqrt %67 : vector<8x1xf32>
    %69 = vector.broadcast %68 : vector<8x1xf32> to vector<8x32xf32>
    %70 = arith.mulf %65, %69 : vector<8x32xf32>
    %c0_35 = arith.constant 0 : index
    %c0_36 = arith.constant 0 : index
    %71 = vector.load %arg8[%c0_35, %c0_36] : memref<1x32xf32, #tpu.memory_space<vmem>>, vector<1x32xf32>
    %72 = vector.broadcast %71 : vector<1x32xf32> to vector<8x32xf32>
    %73 = arith.mulf %70, %72 : vector<8x32xf32>
    %c0_37 = arith.constant 0 : index
    %c0_38 = arith.constant 0 : index
    %74 = vector.load %arg9[%c0_37, %c0_38] : memref<1x32xf32, #tpu.memory_space<vmem>>, vector<1x32xf32>
    %75 = vector.broadcast %74 : vector<1x32xf32> to vector<8x32xf32>
    %76 = arith.addf %73, %75 : vector<8x32xf32>
    %c0_39 = arith.constant 0 : index
    %c0_40 = arith.constant 0 : index
    %77 = vector.load %arg10[%c0_39, %c0_40] : memref<32x4xf32, #tpu.memory_space<vmem>>, vector<32x4xf32>
    %cst_41 = arith.constant dense<0.000000e+00> : vector<8x4xf32>
    %78 = tpu.matmul %76, %77, %cst_41 {dimension_numbers = #tpu.dot_dimension_numbers<[1], [0], [0], [1], [0, 0, 1, 1], [], []>} : vector<8x32xf32>, vector<32x4xf32>, vector<8x4xf32> -> vector<8x4xf32>
    %c0_42 = arith.constant 0 : index
    %c0_43 = arith.constant 0 : index
    %79 = vector.load %arg11[%c0_42, %c0_43] : memref<1x4xf32, #tpu.memory_space<vmem>>, vector<1x4xf32>
    %80 = vector.broadcast %79 : vector<1x4xf32> to vector<8x4xf32>
    %81 = arith.addf %78, %80 : vector<8x4xf32>
    %c0_44 = arith.constant 0 : index
    %c0_45 = arith.constant 0 : index
    %82 = vector.load %arg12[%c0_44, %c0_45] : memref<8x4xf32, #tpu.memory_space<vmem>>, vector<8x4xf32>
    tpu.vector_store %arg12[%c0_44, %c0_45], %81 {strides = array<i32>} : memref<8x4xf32, #tpu.memory_space<vmem>>, vector<8x4xf32>,
    return
  }
  func.func @transform_0(%arg0: i32) -> (i32, i32) {
    %c0_i32 = arith.constant 0 : i32
    %c0_i32_0 = arith.constant 0 : i32
    return %arg0, %c0_i32 : i32, i32
  }
  func.func @transform_1(%arg0: i32) -> (i32, i32) {
    %c0_i32 = arith.constant 0 : i32
    %c0_i32_0 = arith.constant 0 : i32
    %c0_i32_1 = arith.constant 0 : i32
    return %c0_i32, %c0_i32_0 : i32, i32
  }
  func.func @transform_2(%arg0: i32) -> (i32, i32) {
    %c0_i32 = arith.constant 0 : i32
    %c0_i32_0 = arith.constant 0 : i32
    %c0_i32_1 = arith.constant 0 : i32
    return %c0_i32, %c0_i32_0 : i32, i32
  }
  func.func @transform_3(%arg0: i32) -> (i32, i32) {
    %c0_i32 = arith.constant 0 : i32
    %c0_i32_0 = arith.constant 0 : i32
    %c0_i32_1 = arith.constant 0 : i32
    return %c0_i32, %c0_i32_0 : i32, i32
  }
  func.func @transform_4(%arg0: i32) -> (i32, i32) {
    %c0_i32 = arith.constant 0 : i32
    %c0_i32_0 = arith.constant 0 : i32
    %c0_i32_1 = arith.constant 0 : i32
    return %c0_i32, %c0_i32_0 : i32, i32
  }
  func.func @transform_5(%arg0: i32) -> (i32, i32) {
    %c0_i32 = arith.constant 0 : i32
    %c0_i32_0 = arith.constant 0 : i32
    %c0_i32_1 = arith.constant 0 : i32
    return %c0_i32, %c0_i32_0 : i32, i32
  }
  func.func @transform_6(%arg0: i32) -> (i32, i32) {
    %c0_i32 = arith.constant 0 : i32
    %c0_i32_0 = arith.constant 0 : i32
    %c0_i32_1 = arith.constant 0 : i32
    return %c0_i32, %c0_i32_0 : i32, i32
  }
  func.func @transform_7(%arg0: i32) -> (i32, i32) {
    %c0_i32 = arith.constant 0 : i32
    %c0_i32_0 = arith.constant 0 : i32
    %c0_i32_1 = arith.constant 0 : i32
    return %c0_i32, %c0_i32_0 : i32, i32
  }
  func.func @transform_8(%arg0: i32) -> (i32, i32) {
    %c0_i32 = arith.constant 0 : i32
    %c0_i32_0 = arith.constant 0 : i32
    %c0_i32_1 = arith.constant 0 : i32
    return %c0_i32, %c0_i32_0 : i32, i32
  }
  func.func @transform_9(%arg0: i32) -> (i32, i32) {
    %c0_i32 = arith.constant 0 : i32
    %c0_i32_0 = arith.constant 0 : i32
    %c0_i32_1 = arith.constant 0 : i32
    return %c0_i32, %c0_i32_0 : i32, i32
  }
  func.func @transform_10(%arg0: i32) -> (i32, i32) {
    %c0_i32 = arith.constant 0 : i32
    %c0_i32_0 = arith.constant 0 : i32
    %c0_i32_1 = arith.constant 0 : i32
    return %c0_i32, %c0_i32_0 : i32, i32
  }
  func.func @transform_11(%arg0: i32) -> (i32, i32) {
    %c0_i32 = arith.constant 0 : i32
    %c0_i32_0 = arith.constant 0 : i32
    return %arg0, %c0_i32 : i32, i32
  }
  func.func @transform_12(%arg0: i32) -> (i32, i32, i32, i32) {
    %c0_i32 = arith.constant 0 : i32
    %c0_i32_0 = arith.constant 0 : i32
    %c0_i32_1 = arith.constant 0 : i32
    %c0_i32_2 = arith.constant 0 : i32
    return %arg0, %c0_i32, %c0_i32_0, %c0_i32_1 : i32, i32, i32, i32
  }
}

</mosaic_0001>

<llo_original>
// kernel: tpu_custom_call.1
$region0: #{tpu_custom_call.1}
  #allocation0 [shape = 'u32[]', space=smem, size = 0x4, offset = 0x4, fixed_abs, tag = 'smem constant byte address 0x4 - core index']
  #allocation1 [shape = 'u32[144,128]{1,0:T(1,128)}', space=vmem, size = 0x12000, scoped, tag = 'internal scratch']
  %s0 = inlined_call_operand.vmem [shape: f32[16,4], index: 0, kind: input, shape index: {}]
  %s1 = inlined_call_operand.hbm [shape: f32[8,32], index: 1, kind: input, shape index: {}]
  %s2 = inlined_call_operand.hbm [shape: f32[4,32], index: 2, kind: input, shape index: {}]
  %s3 = inlined_call_operand.vmem [shape: f32[1,32], index: 3, kind: input, shape index: {}]
  %s4 = inlined_call_operand.vmem [shape: f32[32,96], index: 4, kind: input, shape index: {}]
  %s5 = inlined_call_operand.vmem [shape: f32[32,32], index: 5, kind: input, shape index: {}]
  %s6 = inlined_call_operand.vmem [shape: f32[1,32], index: 6, kind: input, shape index: {}]
  %s7 = inlined_call_operand.vmem [shape: f32[1,32], index: 7, kind: input, shape index: {}]
  %s8 = inlined_call_operand.vmem [shape: f32[1,32], index: 8, kind: input, shape index: {}]
  %s9 = inlined_call_operand.vmem [shape: f32[32,4], index: 9, kind: input, shape index: {}]
  %s10 = inlined_call_operand.vmem [shape: f32[1,4], index: 10, kind: input, shape index: {}]
  %s11 = inlined_call_operand.vmem [shape: f32[16,4], index: 11, kind: output, shape index: {0}]
  %s12 = inlined_call_operand.hbm [shape: f32[2,2,8,8], index: 12, kind: output, shape index: {1}]
  %13 = xla_tuple %s11, %s12
  %s14 = sld [smem:[#allocation0]]
  $region93: #{tpu_custom_call.1} parent=0
    _
  %s16 = ssub.s32 1, %s14
  %s17 = scalar_select 0, %s16, %s14
  $region1: #{tpu_custom_call.1} parent=0
    #allocation2 [shape = 'u8[4096]{0}', space=vmem, size = 0x1000, scoped, tag = 'input window, operand 1, single buffered']
    #allocation3 [shape = 's32[2]{0}', space=sflag, size = 0x8, scoped, tag = 'scoped memory for tpu_custom_call.1']
    #allocation4 [shape = 's32[2]{0}', space=sflag, size = 0x8, scoped, tag = 'scoped memory for tpu_custom_call.1']
    #allocation5 [shape = 'u8[2048]{0}', space=vmem, size = 0x800, scoped, tag = 'input window, operand 2, single buffered']
    #allocation6 [shape = 's32[1]{0}', space=sflag, size = 0x4, scoped, tag = 'scoped memory for tpu_custom_call.1']
    #allocation7 [shape = 'u8[16384]{0}', space=vmem, size = 0x4000, scoped, tag = 'output window, operand 1']
    %18 = vsyncpa [#allocation3], 0
    %19 = vsyncpa [#allocation6], 0
    %20 = vsyncpa [#allocation4], 0
    %s21 = scalar_lea.sflag [#allocation4], 1
    %22 = vsyncpa %s21, 0
    loop: start=0, step=1, limit=4
    $region2: #{tpu_custom_call.1} parent=1 // loop_pre_header
      _
    $region3: #{tpu_custom_call.1} parent=1 // loop_header
      %s24 = sphi 0, %s28
      %p25 = scmp.ge.s32.totalorder %s24, 4
      %s34 = sphi 0, %s36
      %s37 = sphi 0, %s34
      %s38 = sphi 0, %s37
      %s54 = sphi 0, %s38
      %s58 = sphi 0, %s58
      %s60 = sphi 0, %s58
      %s61 = sphi 0, %s60
      %s75 = sphi 0, %s61
      %s79 = sphi 0, %s79
      %s81 = sphi 0, %s79
      %s82 = sphi 0, %s81
      %s96 = sphi 0, %s82
      %s100 = sphi 0, %s100
      %s102 = sphi 0, %s100
      %s103 = sphi 0, %s102
      %s117 = sphi 0, %s103
      %s121 = sphi 0, %s121
      %s123 = sphi 0, %s121
      %s124 = sphi 0, %s123
      %s138 = sphi 0, %s124
      %s142 = sphi 0, %s142
      %s144 = sphi 0, %s142
      %s145 = sphi 0, %s144
      %s159 = sphi 0, %s145
      %s163 = sphi 0, %s163
      %s165 = sphi 0, %s163
      %s166 = sphi 0, %s165
      %s180 = sphi 0, %s166
      %s184 = sphi 0, %s184
      %s186 = sphi 0, %s184
      %s187 = sphi 0, %s186
      %s201 = sphi 0, %s187
      %s205 = sphi 0, %s205
      %s207 = sphi 0, %s205
      %s208 = sphi 0, %s207
      %s222 = sphi 0, %s208
      %s226 = sphi 0, %s226
      %s228 = sphi 0, %s226
      %s229 = sphi 0, %s228
      %s243 = sphi 0, %s229
      %s247 = sphi 0, %s247
      %s249 = sphi 0, %s247
      %s250 = sphi 0, %s249
      %s264 = sphi 0, %s250
      %s270 = sphi 0, %s272
      %s273 = sphi 0, %s270
      %s274 = sphi 0, %s273
      %s290 = sphi 0, %s274
      %s296 = sphi 0, %s298
      %s299 = sphi 0, %s296
      %s300 = sphi 0, %s299
      %s316 = sphi 0, %s300
    $region4: #{tpu_custom_call.1} parent=1 // loop_header_branch
      %27 = sbr.rel (%p25) target = $region8
    $region5: #{tpu_custom_call.1} parent=1 // loop_body
      %s29 = ssub.s32 %s24, 1
      %s30 = ssub.s32 %s24, 2
      %s31 = sadd.s32 %s24, 1
      %s32 = ssub.s32 %s24, %s31
      %p33 = scmp.eq.s32.totalorder %s32, 0
      %s35 = sadd.s32 %s34, 1
      %s36 = scalar_select %p33, %s34, %s35
      %p39 = pneg %p33
      %p40 = scmp.eq.s32.totalorder %s24, 1
      %p41 = por %p39, %p40
      %p42 = scmp.ne.s32.totalorder %s34, %s37
      %p43 = scmp.eq.s32.totalorder %s24, 0
      %p44 = por %p42, %p43
      %p45 = scmp.ne.s32.totalorder %s34, %s37
      %p46 = scmp.eq.s32.totalorder %s29, 1
      %p47 = por %p45, %p46
      %p48 = scmp.ne.s32.totalorder %s37, %s38
      %p49 = scmp.eq.s32.totalorder %s29, 0
      %p50 = por %p48, %p49
      %p51 = scmp.ne.s32.totalorder %s37, %s38
      %p52 = scmp.eq.s32.totalorder %s30, 1
      %p53 = por %p51, %p52
      %p55 = scmp.ne.s32.totalorder %s38, %s54
      %p56 = scmp.eq.s32.totalorder %s30, 0
      %p57 = por %p55, %p56
      %s59 = sadd.s32 %s58, 1
      %p62 = scmp.eq.s32.totalorder %s24, 1
      %p63 = scmp.ne.s32.totalorder %s58, %s60
      %p64 = scmp.eq.s32.totalorder %s24, 0
      %p65 = por %p63, %p64
      %p66 = scmp.ne.s32.totalorder %s58, %s60
      %p67 = scmp.eq.s32.totalorder %s29, 1
      %p68 = por %p66, %p67
      %p69 = scmp.ne.s32.totalorder %s60, %s61
      %p70 = scmp.eq.s32.totalorder %s29, 0
      %p71 = por %p69, %p70
      %p72 = scmp.ne.s32.totalorder %s60, %s61
      %p73 = scmp.eq.s32.totalorder %s30, 1
      %p74 = por %p72, %p73
      %p76 = scmp.ne.s32.totalorder %s61, %s75
      %p77 = scmp.eq.s32.totalorder %s30, 0
      %p78 = por %p76, %p77
      %s80 = sadd.s32 %s79, 1
      %p83 = scmp.eq.s32.totalorder %s24, 1
      %p84 = scmp.ne.s32.totalorder %s79, %s81
      %p85 = scmp.eq.s32.totalorder %s24, 0
      %p86 = por %p84, %p85
      %p87 = scmp.ne.s32.totalorder %s79, %s81
      %p88 = scmp.eq.s32.totalorder %s29, 1
      %p89 = por %p87, %p88
      %p90 = scmp.ne.s32.totalorder %s81, %s82
      %p91 = scmp.eq.s32.totalorder %s29, 0
      %p92 = por %p90, %p91
      %p93 = scmp.ne.s32.totalorder %s81, %s82
      %p94 = scmp.eq.s32.totalorder %s30, 1
      %p95 = por %p93, %p94
      %p97 = scmp.ne.s32.totalorder %s82, %s96
      %p98 = scmp.eq.s32.totalorder %s30, 0
      %p99 = por %p97, %p98
      %s101 = sadd.s32 %s100, 1
      %p104 = scmp.eq.s32.totalorder %s24, 1
      %p105 = scmp.ne.s32.totalorder %s100, %s102
      %p106 = scmp.eq.s32.totalorder %s24, 0
      %p107 = por %p105, %p106
      %p108 = scmp.ne.s32.totalorder %s100, %s102
      %p109 = scmp.eq.s32.totalorder %s29, 1
      %p110 = por %p108, %p109
      %p111 = scmp.ne.s32.totalorder %s102, %s103
      %p112 = scmp.eq.s32.totalorder %s29, 0
      %p113 = por %p111, %p112
      %p114 = scmp.ne.s32.totalorder %s102, %s103
      %p115 = scmp.eq.s32.totalorder %s30, 1
      %p116 = por %p114, %p115
      %p118 = scmp.ne.s32.totalorder %s103, %s117
      %p119 = scmp.eq.s32.totalorder %s30, 0
      %p120 = por %p118, %p119
      %s122 = sadd.s32 %s121, 1
      %p125 = scmp.eq.s32.totalorder %s24, 1
      %p126 = scmp.ne.s32.totalorder %s121, %s123
      %p127 = scmp.eq.s32.totalorder %s24, 0
      %p128 = por %p126, %p127
      %p129 = scmp.ne.s32.totalorder %s121, %s123
      %p130 = scmp.eq.s32.totalorder %s29, 1
      %p131 = por %p129, %p130
      %p132 = scmp.ne.s32.totalorder %s123, %s124
      %p133 = scmp.eq.s32.totalorder %s29, 0
      %p134 = por %p132, %p133
      %p135 = scmp.ne.s32.totalorder %s123, %s124
      %p136 = scmp.eq.s32.totalorder %s30, 1
      %p137 = por %p135, %p136
      %p139 = scmp.ne.s32.totalorder %s124, %s138
      %p140 = scmp.eq.s32.totalorder %s30, 0
      %p141 = por %p139, %p140
      %s143 = sadd.s32 %s142, 1
      %p146 = scmp.eq.s32.totalorder %s24, 1
      %p147 = scmp.ne.s32.totalorder %s142, %s144
      %p148 = scmp.eq.s32.totalorder %s24, 0
      %p149 = por %p147, %p148
      %p150 = scmp.ne.s32.totalorder %s142, %s144
      %p151 = scmp.eq.s32.totalorder %s29, 1
      %p152 = por %p150, %p151
      %p153 = scmp.ne.s32.totalorder %s144, %s145
      %p154 = scmp.eq.s32.totalorder %s29, 0
      %p155 = por %p153, %p154
      %p156 = scmp.ne.s32.totalorder %s144, %s145
      %p157 = scmp.eq.s32.totalorder %s30, 1
      %p158 = por %p156, %p157
      %p160 = scmp.ne.s32.totalorder %s145, %s159
      %p161 = scmp.eq.s32.totalorder %s30, 0
      %p162 = por %p160, %p161
      %s164 = sadd.s32 %s163, 1
      %p167 = scmp.eq.s32.totalorder %s24, 1
      %p168 = scmp.ne.s32.totalorder %s163, %s165
      %p169 = scmp.eq.s32.totalorder %s24, 0
      %p170 = por %p168, %p169
      %p171 = scmp.ne.s32.totalorder %s163, %s165
      %p172 = scmp.eq.s32.totalorder %s29, 1
      %p173 = por %p171, %p172
      %p174 = scmp.ne.s32.totalorder %s165, %s166
      %p175 = scmp.eq.s32.totalorder %s29, 0
      %p176 = por %p174, %p175
      %p177 = scmp.ne.s32.totalorder %s165, %s166
      %p178 = scmp.eq.s32.totalorder %s30, 1
      %p179 = por %p177, %p178
      %p181 = scmp.ne.s32.totalorder %s166, %s180
      %p182 = scmp.eq.s32.totalorder %s30, 0
      %p183 = por %p181, %p182
      %s185 = sadd.s32 %s184, 1
      %p188 = scmp.eq.s32.totalorder %s24, 1
      %p189 = scmp.ne.s32.totalorder %s184, %s186
      %p190 = scmp.eq.s32.totalorder %s24, 0
      %p191 = por %p189, %p190
      %p192 = scmp.ne.s32.totalorder %s184, %s186
      %p193 = scmp.eq.s32.totalorder %s29, 1
      %p194 = por %p192, %p193
      %p195 = scmp.ne.s32.totalorder %s186, %s187
      %p196 = scmp.eq.s32.totalorder %s29, 0
      %p197 = por %p195, %p196
      %p198 = scmp.ne.s32.totalorder %s186, %s187
      %p199 = scmp.eq.s32.totalorder %s30, 1
      %p200 = por %p198, %p199
      %p202 = scmp.ne.s32.totalorder %s187, %s201
      %p203 = scmp.eq.s32.totalorder %s30, 0
      %p204 = por %p202, %p203
      %s206 = sadd.s32 %s205, 1
      %p209 = scmp.eq.s32.totalorder %s24, 1
      %p210 = scmp.ne.s32.totalorder %s205, %s207
      %p211 = scmp.eq.s32.totalorder %s24, 0
      %p212 = por %p210, %p211
      %p213 = scmp.ne.s32.totalorder %s205, %s207
      %p214 = scmp.eq.s32.totalorder %s29, 1
      %p215 = por %p213, %p214
      %p216 = scmp.ne.s32.totalorder %s207, %s208
      %p217 = scmp.eq.s32.totalorder %s29, 0
      %p218 = por %p216, %p217
      %p219 = scmp.ne.s32.totalorder %s207, %s208
      %p220 = scmp.eq.s32.totalorder %s30, 1
      %p221 = por %p219, %p220
      %p223 = scmp.ne.s32.totalorder %s208, %s222
      %p224 = scmp.eq.s32.totalorder %s30, 0
      %p225 = por %p223, %p224
      %s227 = sadd.s32 %s226, 1
      %p230 = scmp.eq.s32.totalorder %s24, 1
      %p231 = scmp.ne.s32.totalorder %s226, %s228
      %p232 = scmp.eq.s32.totalorder %s24, 0
      %p233 = por %p231, %p232
      %p234 = scmp.ne.s32.totalorder %s226, %s228
      %p235 = scmp.eq.s32.totalorder %s29, 1
      %p236 = por %p234, %p235
      %p237 = scmp.ne.s32.totalorder %s228, %s229
      %p238 = scmp.eq.s32.totalorder %s29, 0
      %p239 = por %p237, %p238
      %p240 = scmp.ne.s32.totalorder %s228, %s229
      %p241 = scmp.eq.s32.totalorder %s30, 1
      %p242 = por %p240, %p241
      %p244 = scmp.ne.s32.totalorder %s229, %s243
      %p245 = scmp.eq.s32.totalorder %s30, 0
      %p246 = por %p244, %p245
      %s248 = sadd.s32 %s247, 1
      %p251 = scmp.eq.s32.totalorder %s24, 1
      %p252 = scmp.ne.s32.totalorder %s247, %s249
      %p253 = scmp.eq.s32.totalorder %s24, 0
      %p254 = por %p252, %p253
      %p255 = scmp.ne.s32.totalorder %s247, %s249
      %p256 = scmp.eq.s32.totalorder %s29, 1
      %p257 = por %p255, %p256
      %p258 = scmp.ne.s32.totalorder %s249, %s250
      %p259 = scmp.eq.s32.totalorder %s29, 0
      %p260 = por %p258, %p259
      %p261 = scmp.ne.s32.totalorder %s249, %s250
      %p262 = scmp.eq.s32.totalorder %s30, 1
      %p263 = por %p261, %p262
      %p265 = scmp.ne.s32.totalorder %s250, %s264
      %p266 = scmp.eq.s32.totalorder %s30, 0
      %p267 = por %p265, %p266
      %s268 = ssub.s32 %s24, %s31
      %p269 = scmp.eq.s32.totalorder %s268, 0
      %s271 = sadd.s32 %s270, 1
      %s272 = scalar_select %p269, %s270, %s271
      %p275 = pneg %p269
      %p276 = scmp.eq.s32.totalorder %s24, 1
      %p277 = por %p275, %p276
      %p278 = scmp.ne.s32.totalorder %s270, %s273
      %p279 = scmp.eq.s32.totalorder %s24, 0
      %p280 = por %p278, %p279
      %p281 = scmp.ne.s32.totalorder %s270, %s273
      %p282 = scmp.eq.s32.totalorder %s29, 1
      %p283 = por %p281, %p282
      %p284 = scmp.ne.s32.totalorder %s273, %s274
      %p285 = scmp.eq.s32.totalorder %s29, 0
      %p286 = por %p284, %p285
      %p287 = scmp.ne.s32.totalorder %s273, %s274
      %p288 = scmp.eq.s32.totalorder %s30, 1
      %p289 = por %p287, %p288
      %p291 = scmp.ne.s32.totalorder %s274, %s290
      %p292 = scmp.eq.s32.totalorder %s30, 0
      %p293 = por %p291, %p292
      %s294 = ssub.s32 %s24, %s31
      %p295 = scmp.eq.s32.totalorder %s294, 0
      %s297 = sadd.s32 %s296, 1
      %s298 = scalar_select %p295, %s296, %s297
      %p301 = pneg %p295
      %p302 = scmp.eq.s32.totalorder %s24, 1
      %p303 = por %p301, %p302
      %p304 = scmp.ne.s32.totalorder %s296, %s299
      %p305 = scmp.eq.s32.totalorder %s24, 0
      %p306 = por %p304, %p305
      %p307 = scmp.ne.s32.totalorder %s296, %s299
      %p308 = scmp.eq.s32.totalorder %s29, 1
      %p309 = por %p307, %p308
      %p310 = scmp.ne.s32.totalorder %s299, %s300
      %p311 = scmp.eq.s32.totalorder %s29, 0
      %p312 = por %p310, %p311
      %p313 = scmp.ne.s32.totalorder %s299, %s300
      %p314 = scmp.eq.s32.totalorder %s30, 1
      %p315 = por %p313, %p314
      %p317 = scmp.ne.s32.totalorder %s300, %s316
      %p318 = scmp.eq.s32.totalorder %s30, 0
      %p319 = por %p317, %p318
      %p320 = scmp.le.s32.totalorder 1, %s24
      %p321 = scmp.lt.s32.totalorder %s24, 3
      %p322 = pnand %p320, %p321
      %p323 = pneg %p322
      // Predicated region
      $region9: #{tpu_custom_call.1} parent=5 // pred_check
        _
      $region10: #{tpu_custom_call.1} parent=5 // pred_check_branch
        %325 = sbr.rel (%p322) target = $region12
      $region11: #{tpu_custom_call.1} parent=5 // pred_region
        %s326 = ssub.s32 %s24, 1
        // Predicated region
        $region13: #{tpu_custom_call.1} parent=11 // pred_check
          %p327 = pneg %p71
        $region14: #{tpu_custom_call.1} parent=11 // pred_check_branch
          %329 = sbr.rel (%p327) target = $region16
        $region15: #{tpu_custom_call.1} parent=11 // pred_region
          %s331 = ssub.s32 128, 128
          %332 = vsyncadd [#allocation3], %s331
          %s334 = sshll.u32 [#allocation2], 4
          %s335 = int_to_ptr.vmem [resolvable:$true] %s334
          %337 = dma.hbm_to_vmem [thread:$0]  %s1, 128, %s335, [#allocation3]
        $region16: #{tpu_custom_call.1} parent=11 // pred_fallthru
          _
        // Predicated region
        $region17: #{tpu_custom_call.1} parent=11 // pred_check
          %p338 = pneg %p92
        $region18: #{tpu_custom_call.1} parent=11 // pred_check_branch
          %340 = sbr.rel (%p338) target = $region20
        $region19: #{tpu_custom_call.1} parent=11 // pred_region
          %s342 = ssub.s32 64, 64
          %343 = vsyncadd [#allocation6], %s342
          %s345 = sshll.u32 [#allocation5], 4
          %s346 = int_to_ptr.vmem [resolvable:$true] %s345
          %348 = dma.hbm_to_vmem [thread:$0]  %s2, 64, %s346, [#allocation6]
        $region20: #{tpu_custom_call.1} parent=11 // pred_fallthru
          _
        // Predicated region
        $region21: #{tpu_custom_call.1} parent=11 // pred_check
          %p349 = pneg %p113
        $region22: #{tpu_custom_call.1} parent=11 // pred_check_branch
          %351 = sbr.rel (%p349) target = $region24
        $region23: #{tpu_custom_call.1} parent=11 // pred_region
          _
        $region24: #{tpu_custom_call.1} parent=11 // pred_fallthru
          _
        // Predicated region
        $region25: #{tpu_custom_call.1} parent=11 // pred_check
          %p352 = pneg %p134
        $region26: #{tpu_custom_call.1} parent=11 // pred_check_branch
          %354 = sbr.rel (%p352) target = $region28
        $region27: #{tpu_custom_call.1} parent=11 // pred_region
          _
        $region28: #{tpu_custom_call.1} parent=11 // pred_fallthru
          _
        // Predicated region
        $region29: #{tpu_custom_call.1} parent=11 // pred_check
          %p355 = pneg %p155
        $region30: #{tpu_custom_call.1} parent=11 // pred_check_branch
          %357 = sbr.rel (%p355) target = $region32
        $region31: #{tpu_custom_call.1} parent=11 // pred_region
          _
        $region32: #{tpu_custom_call.1} parent=11 // pred_fallthru
          _
        // Predicated region
        $region33: #{tpu_custom_call.1} parent=11 // pred_check
          %p358 = pneg %p176
        $region34: #{tpu_custom_call.1} parent=11 // pred_check_branch
          %360 = sbr.rel (%p358) target = $region36
        $region35: #{tpu_custom_call.1} parent=11 // pred_region
          _
        $region36: #{tpu_custom_call.1} parent=11 // pred_fallthru
          _
        // Predicated region
        $region37: #{tpu_custom_call.1} parent=11 // pred_check
          %p361 = pneg %p197
        $region38: #{tpu_custom_call.1} parent=11 // pred_check_branch
          %363 = sbr.rel (%p361) target = $region40
        $region39: #{tpu_custom_call.1} parent=11 // pred_region
          _
        $region40: #{tpu_custom_call.1} parent=11 // pred_fallthru
          _
        // Predicated region
        $region41: #{tpu_custom_call.1} parent=11 // pred_check
          %p364 = pneg %p218
        $region42: #{tpu_custom_call.1} parent=11 // pred_check_branch
          %366 = sbr.rel (%p364) target = $region44
        $region43: #{tpu_custom_call.1} parent=11 // pred_region
          _
        $region44: #{tpu_custom_call.1} parent=11 // pred_fallthru
          _
        // Predicated region
        $region45: #{tpu_custom_call.1} parent=11 // pred_check
          %p367 = pneg %p239
        $region46: #{tpu_custom_call.1} parent=11 // pred_check_branch
          %369 = sbr.rel (%p367) target = $region48
        $region47: #{tpu_custom_call.1} parent=11 // pred_region
          _
        $region48: #{tpu_custom_call.1} parent=11 // pred_fallthru
          _
        // Predicated region
        $region49: #{tpu_custom_call.1} parent=11 // pred_check
          %p370 = pneg %p260
        $region50: #{tpu_custom_call.1} parent=11 // pred_check_branch
          %372 = sbr.rel (%p370) target = $region52
        $region51: #{tpu_custom_call.1} parent=11 // pred_region
          _
        $region52: #{tpu_custom_call.1} parent=11 // pred_fallthru
          _
      $region12: #{tpu_custom_call.1} parent=5 // pred_fallthru
        _
      %p373 = scmp.lt.s32.totalorder %s24, 2
      // Predicated region
      $region53: #{tpu_custom_call.1} parent=5 // pred_check
        %p374 = pneg %p373
      $region54: #{tpu_custom_call.1} parent=5 // pred_check_branch
        %376 = sbr.rel (%p374) target = $region56
      $region55: #{tpu_custom_call.1} parent=5 // pred_region
        // Predicated region
        $region57: #{tpu_custom_call.1} parent=55 // pred_check
          %p377 = pneg %p44
        $region58: #{tpu_custom_call.1} parent=55 // pred_check_branch
          %379 = sbr.rel (%p377) target = $region60
        $region59: #{tpu_custom_call.1} parent=55 // pred_region
          %p380 = scmp.lt.s32.totalorder %s24, 1
          %s381 = scalar_select %p380, %s24, 1
          %s382 = smul.addr %s381, 8
          %s383 = scalar_lea.vmem %s0, %s382
        $region60: #{tpu_custom_call.1} parent=55 // pred_fallthru
          _
      $region56: #{tpu_custom_call.1} parent=5 // pred_fallthru
        _
      %p384 = scmp.le.s32.totalorder 1, %s24
      %p385 = scmp.lt.s32.totalorder %s24, 3
      %p386 = pnand %p384, %p385
      %p387 = pneg %p386
      // Predicated region
      $region61: #{tpu_custom_call.1} parent=5 // pred_check
        _
      $region62: #{tpu_custom_call.1} parent=5 // pred_check_branch
        %389 = sbr.rel (%p386) target = $region64
      $region63: #{tpu_custom_call.1} parent=5 // pred_region
        %s390 = ssub.s32 %s24, 1
        // Predicated region
        $region65: #{tpu_custom_call.1} parent=63 // pred_check
          %p391 = pneg %p71
        $region66: #{tpu_custom_call.1} parent=63 // pred_check_branch
          %393 = sbr.rel (%p391) target = $region68
        $region67: #{tpu_custom_call.1} parent=63 // pred_region
          %394 = dma.done [#allocation3], 128
        $region68: #{tpu_custom_call.1} parent=63 // pred_fallthru
          _
        // Predicated region
        $region69: #{tpu_custom_call.1} parent=63 // pred_check
          %p395 = pneg %p92
        $region70: #{tpu_custom_call.1} parent=63 // pred_check_branch
          %397 = sbr.rel (%p395) target = $region72
        $region71: #{tpu_custom_call.1} parent=63 // pred_region
          %398 = dma.done [#allocation6], 64
        $region72: #{tpu_custom_call.1} parent=63 // pred_fallthru
          _
        %p399 = scmp.lt.s32.totalorder %s29, 1
        %s400 = scalar_select %p399, %s29, 1
        %s401 = smul.addr %s400, 8
        %s402 = scalar_lea.vmem %s0, %s401
        %p403 = pneg %p50
        %p404 = pneg %p47
        %p405 = pneg %p71
        %p406 = pneg %p68
        %p407 = pneg %p92
        %p408 = pneg %p89
        %p409 = pneg %p113
        %p410 = pneg %p110
        %p411 = pneg %p134
        %p412 = pneg %p131
        %p413 = pneg %p155
        %p414 = pneg %p152
        %p415 = pneg %p176
        %p416 = pneg %p173
        %p417 = pneg %p197
        %p418 = pneg %p194
        %p419 = pneg %p218
        %p420 = pneg %p215
        %p421 = pneg %p239
        %p422 = pneg %p236
        %p423 = pneg %p260
        %p424 = pneg %p257
        %p425 = pneg %p286
        %p426 = pneg %p283
        %p427 = scmp.lt.s32.totalorder %s29, 1
        %s428 = scalar_select %p427, %s29, 1
        %s429 = smul.addr %s428, 8
        %s430 = scalar_lea.vmem %s11, %s429
        %p431 = pneg %p312
        %p432 = pneg %p309
        %s433 = sand.u32 %s299, 1
        %s434 = scalar_lea.sflag [#allocation4], %s433
        %s435 = sand.u32 %s299, 1
        %s436 = smul.addr %s435, 16
        %s437 = scalar_lea.vmem [#allocation7], %s436
        %p438 = scmp.lt.s32.totalorder %s29, 1
        %s439 = scalar_select %p438, %s29, 1
        %s440 = smul.addr %s439, 8
        %s441 = scalar_lea.vmem %s0, %s440
        %p442 = scmp.lt.s32.totalorder %s29, 1
        %s443 = scalar_select %p442, %s29, 1
        %s444 = smul.addr %s443, 8
        %s445 = scalar_lea.vmem %s11, %s444
        %v446 = vld [vmem:[%s441] sm:$0xff]
        %v447 = vld [vmem:[#allocation5] sm:$0xf]
        %v448 = vld [vmem:[%s3] sm:$0x1]
        %v450 = vlaneseq
        %v451 = vshrl.u32 %v450, 7
        %v452 = vsub.s32 0, %v451
        %v453 = vrot.slane %v448, %v452
        %vm455 = vcmask 31744
        %v457 = vsel %vm455, %v446, 0
        %vm459 = vcmask 1043456
        %v461 = vsel %vm459, %v447, 0
        %463 = vmatprep.subr.mxu0 0.0
        %464 = vmatpush1.msra.mxu0 %v461
        %465 = vmatprep.subr.mxu0 0.0
        %466 = vmatpush1.msra.mxu0 0.0
        %467 = vmatprep.subr.mxu0 0.0
        %468 = vmatpush1.msra.mxu0 0.0
        %469 = vmatprep.subr.mxu0 0.0
        %470 = vmatpush1.msra.mxu0 0.0
        %471 = vmatprep.subr.mxu0 0.0
        %472 = vmatpush1.msra.mxu0 0.0
        %473 = vmatprep.subr.mxu0 0.0
        %474 = vmatpush1.msra.mxu0 0.0
        %475 = vmatprep.subr.mxu0 0.0
        %476 = vmatpush1.msra.mxu0 0.0
        %477 = vmatprep.subr.mxu0 0.0
        %478 = vmatpush1.msra.mxu0 0.0
        %479 = vmatprep.subr.mxu0 0.0
        %480 = vmatpush1.msra.mxu0 0.0
        %481 = vmatprep.subr.mxu0 0.0
        %482 = vmatpush1.msra.mxu0 0.0
        %483 = vmatprep.subr.mxu0 0.0
        %484 = vmatpush1.msra.mxu0 0.0
        %485 = vmatprep.subr.mxu0 0.0
        %486 = vmatpush1.msra.mxu0 0.0
        %487 = vmatprep.subr.mxu0 0.0
        %488 = vmatpush1.msra.mxu0 0.0
        %489 = vmatprep.subr.mxu0 0.0
        %490 = vmatpush1.msra.mxu0 0.0
        %491 = vmatprep.subr.mxu0 0.0
        %492 = vmatpush1.msra.mxu0 0.0
        %493 = vmatprep.subr.mxu0 0.0
        %494 = vmatpush1.msra.mxu0 0.0
        %495 = vmatprep.subr.mxu0 0.0
        %496 = vmatpush1.msra.mxu0 0.0
        %497 = vmatprep.subr.mxu0 0.0
        %498 = vmatpush1.msra.mxu0 0.0
        %499 = vmatprep.subr.mxu0 0.0
        %500 = vmatpush1.msra.mxu0 0.0
        %501 = vmatprep.subr.mxu0 0.0
        %502 = vmatpush1.msra.mxu0 0.0
        %503 = vmatprep.subr.mxu0 0.0
        %504 = vmatpush1.msra.mxu0 0.0
        %505 = vmatprep.subr.mxu0 0.0
        %506 = vmatpush1.msra.mxu0 0.0
        %507 = vmatprep.subr.mxu0 0.0
        %508 = vmatpush1.msra.mxu0 0.0
        %509 = vmatprep.subr.mxu0 0.0
        %510 = vmatpush1.msra.mxu0 0.0
        %511 = vmatprep.subr.mxu0 0.0
        %512 = vmatpush1.msra.mxu0 0.0
        %513 = vmatprep.subr.mxu0 0.0
        %514 = vmatpush1.msra.mxu0 0.0
        %515 = vmatprep.subr.mxu0 0.0
        %516 = vmatpush1.msra.mxu0 0.0
        %517 = vmatprep.subr.mxu0 0.0
        %518 = vmatpush1.msra.mxu0 0.0
        %519 = vmatprep.subr.mxu0 0.0
        %520 = vmatpush1.msra.mxu0 0.0
        %521 = vmatprep.subr.mxu0 0.0
        %522 = vmatpush1.msra.mxu0 0.0
        %523 = vmatprep.subr.mxu0 0.0
        %524 = vmatpush1.msra.mxu0 0.0
        %525 = vmatprep.subr.mxu0 0.0
        %526 = vmatpush1.msra.mxu0 0.0
        %527 = vmatprep.mubr.f32.mxu0 0.0
        %528 = vmatmul.mubr.f32.gmra.mrb[0].mxu0 %v457
        %v529 = vpop.f32.mrb[0].mxu0
        %v530 = vadd.f32 %v453, %v529
        %v531 = vpop.f32.mrb[0].mxu0
        %532 = vdwg.mxu0
        %v533 = vld [vmem:[#allocation2] sm:$0xff]
        %v534 = vadd.f32 %v530, %v533
        %v535 = vld [vmem:[%s4] sm:$0xff]
        %v536 = vld [vmem:[%s4 + $0x8] sm:$0xff]
        %v537 = vld [vmem:[%s4 + $0x10] sm:$0xff]
        %v538 = vld [vmem:[%s4 + $0x18] sm:$0xff]
        %vm539 = vcmask 261120
        %v541 = vsel %vm539, %v534, 0
        %543 = vmatprep.subr.mxu0 0.0
        %544 = vmatpush1.msra.mxu0 %v535
        %545 = vmatprep.subr.mxu0 0.0
        %546 = vmatpush1.msra.mxu0 %v536
        %547 = vmatprep.subr.mxu0 0.0
        %548 = vmatpush1.msra.mxu0 %v537
        %549 = vmatprep.subr.mxu0 0.0
        %550 = vmatpush1.msra.mxu0 %v538
        %551 = vmatprep.subr.mxu0 0.0
        %552 = vmatpush1.msra.mxu0 0.0
        %553 = vmatprep.subr.mxu0 0.0
        %554 = vmatpush1.msra.mxu0 0.0
        %555 = vmatprep.subr.mxu0 0.0
        %556 = vmatpush1.msra.mxu0 0.0
        %557 = vmatprep.subr.mxu0 0.0
        %558 = vmatpush1.msra.mxu0 0.0
        %559 = vmatprep.subr.mxu0 0.0
        %560 = vmatpush1.msra.mxu0 0.0
        %561 = vmatprep.subr.mxu0 0.0
        %562 = vmatpush1.msra.mxu0 0.0
        %563 = vmatprep.subr.mxu0 0.0
        %564 = vmatpush1.msra.mxu0 0.0
        %565 = vmatprep.subr.mxu0 0.0
        %566 = vmatpush1.msra.mxu0 0.0
        %567 = vmatprep.subr.mxu0 0.0
        %568 = vmatpush1.msra.mxu0 0.0
        %569 = vmatprep.subr.mxu0 0.0
        %570 = vmatpush1.msra.mxu0 0.0
        %571 = vmatprep.subr.mxu0 0.0
        %572 = vmatpush1.msra.mxu0 0.0
        %573 = vmatprep.subr.mxu0 0.0
        %574 = vmatpush1.msra.mxu0 0.0
        %575 = vmatprep.subr.mxu0 0.0
        %576 = vmatpush1.msra.mxu0 0.0
        %577 = vmatprep.subr.mxu0 0.0
        %578 = vmatpush1.msra.mxu0 0.0
        %579 = vmatprep.subr.mxu0 0.0
        %580 = vmatpush1.msra.mxu0 0.0
        %581 = vmatprep.subr.mxu0 0.0
        %582 = vmatpush1.msra.mxu0 0.0
        %583 = vmatprep.subr.mxu0 0.0
        %584 = vmatpush1.msra.mxu0 0.0
        %585 = vmatprep.subr.mxu0 0.0
        %586 = vmatpush1.msra.mxu0 0.0
        %587 = vmatprep.subr.mxu0 0.0
        %588 = vmatpush1.msra.mxu0 0.0
        %589 = vmatprep.subr.mxu0 0.0
        %590 = vmatpush1.msra.mxu0 0.0
        %591 = vmatprep.subr.mxu0 0.0
        %592 = vmatpush1.msra.mxu0 0.0
        %593 = vmatprep.subr.mxu0 0.0
        %594 = vmatpush1.msra.mxu0 0.0
        %595 = vmatprep.subr.mxu0 0.0
        %596 = vmatpush1.msra.mxu0 0.0
        %597 = vmatprep.subr.mxu0 0.0
        %598 = vmatpush1.msra.mxu0 0.0
        %599 = vmatprep.subr.mxu0 0.0
        %600 = vmatpush1.msra.mxu0 0.0
        %601 = vmatprep.subr.mxu0 0.0
        %602 = vmatpush1.msra.mxu0 0.0
        %603 = vmatprep.subr.mxu0 0.0
        %604 = vmatpush1.msra.mxu0 0.0
        %605 = vmatprep.subr.mxu0 0.0
        %606 = vmatpush1.msra.mxu0 0.0
        %607 = vmatprep.mubr.f32.mxu0 0.0
        %608 = vmatmul.mubr.f32.gmra.mrb[0].mxu0 %v541
        %v609 = vpop.f32.mrb[0].mxu0
        %v610 = vadd.f32 0.0, %v609
        %v611 = vpop.f32.mrb[0].mxu0
        %612 = vdwg.mxu0
        %614 = vrot.lane.b32.xlu0 %v610, 96
        %v615 = vpop.permute.xlu0 %614
        %vm616 = vcmask 130048
        %v617 = vsel %vm616, %v610, 0
        %v619 = vsel %vm616, %v615, 0
        %621 = vmatprep.subr.mxu0 0.0
        %622 = vmatpush1.xpose.msra.mxu0 %v619
        %623 = vmatprep.subr.mxu0 0.0
        %624 = vmatpush1.xpose.msra.mxu0 0.0
        %625 = vmatprep.subr.mxu0 0.0
        %626 = vmatpush1.xpose.msra.mxu0 0.0
        %627 = vmatprep.subr.mxu0 0.0
        %628 = vmatpush1.xpose.msra.mxu0 0.0
        %629 = vmatprep.subr.mxu0 0.0
        %630 = vmatpush1.xpose.msra.mxu0 0.0
        %631 = vmatprep.subr.mxu0 0.0
        %632 = vmatpush1.xpose.msra.mxu0 0.0
        %633 = vmatprep.subr.mxu0 0.0
        %634 = vmatpush1.xpose.msra.mxu0 0.0
        %635 = vmatprep.subr.mxu0 0.0
        %636 = vmatpush1.xpose.msra.mxu0 0.0
        %637 = vmatprep.subr.mxu0 0.0
        %638 = vmatpush1.xpose.msra.mxu0 0.0
        %639 = vmatprep.subr.mxu0 0.0
        %640 = vmatpush1.xpose.msra.mxu0 0.0
        %641 = vmatprep.subr.mxu0 0.0
        %642 = vmatpush1.xpose.msra.mxu0 0.0
        %643 = vmatprep.subr.mxu0 0.0
        %644 = vmatpush1.xpose.msra.mxu0 0.0
        %645 = vmatprep.subr.mxu0 0.0
        %646 = vmatpush1.xpose.msra.mxu0 0.0
        %647 = vmatprep.subr.mxu0 0.0
        %648 = vmatpush1.xpose.msra.mxu0 0.0
        %649 = vmatprep.subr.mxu0 0.0
        %650 = vmatpush1.xpose.msra.mxu0 0.0
        %651 = vmatprep.subr.mxu0 0.0
        %652 = vmatpush1.xpose.msra.mxu0 0.0
        %653 = vmatprep.subr.mxu0 0.0
        %654 = vmatpush1.xpose.msra.mxu0 0.0
        %655 = vmatprep.subr.mxu0 0.0
        %656 = vmatpush1.xpose.msra.mxu0 0.0
        %657 = vmatprep.subr.mxu0 0.0
        %658 = vmatpush1.xpose.msra.mxu0 0.0
        %659 = vmatprep.subr.mxu0 0.0
        %660 = vmatpush1.xpose.msra.mxu0 0.0
        %661 = vmatprep.subr.mxu0 0.0
        %662 = vmatpush1.xpose.msra.mxu0 0.0
        %663 = vmatprep.subr.mxu0 0.0
        %664 = vmatpush1.xpose.msra.mxu0 0.0
        %665 = vmatprep.subr.mxu0 0.0
        %666 = vmatpush1.xpose.msra.mxu0 0.0
        %667 = vmatprep.subr.mxu0 0.0
        %668 = vmatpush1.xpose.msra.mxu0 0.0
        %669 = vmatprep.subr.mxu0 0.0
        %670 = vmatpush1.xpose.msra.mxu0 0.0
        %671 = vmatprep.subr.mxu0 0.0
        %672 = vmatpush1.xpose.msra.mxu0 0.0
        %673 = vmatprep.subr.mxu0 0.0
        %674 = vmatpush1.xpose.msra.mxu0 0.0
        %675 = vmatprep.subr.mxu0 0.0
        %676 = vmatpush1.xpose.msra.mxu0 0.0
        %677 = vmatprep.subr.mxu0 0.0
        %678 = vmatpush1.xpose.msra.mxu0 0.0
        %679 = vmatprep.subr.mxu0 0.0
        %680 = vmatpush1.xpose.msra.mxu0 0.0
        %681 = vmatprep.subr.mxu0 0.0
        %682 = vmatpush1.xpose.msra.mxu0 0.0
        %683 = vmatprep.subr.mxu0 0.0
        %684 = vmatpush1.xpose.msra.mxu0 0.0
        %685 = vmatprep.mubr.f32.mxu0 0.0
        %686 = vmatmul.mubr.f32.gmra.mrb[0].mxu0 %v617
        %v687 = vpop.f32.mrb[0].mxu0
        %v688 = vadd.f32 0.0, %v687
        %v689 = vpop.f32.mrb[0].mxu0
        %690 = vdwg.mxu0
        %vm691 = vcmask 64512
        %v692 = vsel %vm691, %v688, -inf
        %693 = vmax.xlane.f32.xlu0 %v692
        %v694 = vpop.xlane.xlu0 %693
        %v695 = vsub.f32 %v688, %v694
        %v696 = vmul.f32 %v695, 1.442695
        %v697 = vpow.pop %v696
        %v698 = vsel %vm691, %v697, 0.0
        %699 = vadd.xlane.f32.xlu0 %v698
        %v700 = vpop.xlane.xlu0 %699
        %v701 = vrcp.pop %v700
        %v702 = vmul.f32 %v697, %v701
        %703 = vst.msk [vmem:[%s437] sm:$0xff] %vm691, %v702
        %704 = vrot.lane.b32.xlu0 %v610, 64
        %v705 = vpop.permute.xlu0 %704
        %v708 = vsel %vm691, %v702, 0
        %710 = vmatprep.subr.mxu0 0.0
        %711 = vmatpush1.msra.mxu0 %v705
        %712 = vmatprep.subr.mxu0 0.0
        %713 = vmatpush1.msra.mxu0 0.0
        %714 = vmatprep.subr.mxu0 0.0
        %715 = vmatpush1.msra.mxu0 0.0
        %716 = vmatprep.subr.mxu0 0.0
        %717 = vmatpush1.msra.mxu0 0.0
        %718 = vmatprep.subr.mxu0 0.0
        %719 = vmatpush1.msra.mxu0 0.0
        %720 = vmatprep.subr.mxu0 0.0
        %721 = vmatpush1.msra.mxu0 0.0
        %722 = vmatprep.subr.mxu0 0.0
        %723 = vmatpush1.msra.mxu0 0.0
        %724 = vmatprep.subr.mxu0 0.0
        %725 = vmatpush1.msra.mxu0 0.0
        %726 = vmatprep.subr.mxu0 0.0
        %727 = vmatpush1.msra.mxu0 0.0
        %728 = vmatprep.subr.mxu0 0.0
        %729 = vmatpush1.msra.mxu0 0.0
        %730 = vmatprep.subr.mxu0 0.0
        %731 = vmatpush1.msra.mxu0 0.0
        %732 = vmatprep.subr.mxu0 0.0
        %733 = vmatpush1.msra.mxu0 0.0
        %734 = vmatprep.subr.mxu0 0.0
        %735 = vmatpush1.msra.mxu0 0.0
        %736 = vmatprep.subr.mxu0 0.0
        %737 = vmatpush1.msra.mxu0 0.0
        %738 = vmatprep.subr.mxu0 0.0
        %739 = vmatpush1.msra.mxu0 0.0
        %740 = vmatprep.subr.mxu0 0.0
        %741 = vmatpush1.msra.mxu0 0.0
        %742 = vmatprep.subr.mxu0 0.0
        %743 = vmatpush1.msra.mxu0 0.0
        %744 = vmatprep.subr.mxu0 0.0
        %745 = vmatpush1.msra.mxu0 0.0
        %746 = vmatprep.subr.mxu0 0.0
        %747 = vmatpush1.msra.mxu0 0.0
        %748 = vmatprep.subr.mxu0 0.0
        %749 = vmatpush1.msra.mxu0 0.0
        %750 = vmatprep.subr.mxu0 0.0
        %751 = vmatpush1.msra.mxu0 0.0
        %752 = vmatprep.subr.mxu0 0.0
        %753 = vmatpush1.msra.mxu0 0.0
        %754 = vmatprep.subr.mxu0 0.0
        %755 = vmatpush1.msra.mxu0 0.0
        %756 = vmatprep.subr.mxu0 0.0
        %757 = vmatpush1.msra.mxu0 0.0
        %758 = vmatprep.subr.mxu0 0.0
        %759 = vmatpush1.msra.mxu0 0.0
        %760 = vmatprep.subr.mxu0 0.0
        %761 = vmatpush1.msra.mxu0 0.0
        %762 = vmatprep.subr.mxu0 0.0
        %763 = vmatpush1.msra.mxu0 0.0
        %764 = vmatprep.subr.mxu0 0.0
        %765 = vmatpush1.msra.mxu0 0.0
        %766 = vmatprep.subr.mxu0 0.0
        %767 = vmatpush1.msra.mxu0 0.0
        %768 = vmatprep.subr.mxu0 0.0
        %769 = vmatpush1.msra.mxu0 0.0
        %770 = vmatprep.subr.mxu0 0.0
        %771 = vmatpush1.msra.mxu0 0.0
        %772 = vmatprep.subr.mxu0 0.0
        %773 = vmatpush1.msra.mxu0 0.0
        %774 = vmatprep.mubr.f32.mxu0 0.0
        %775 = vmatmul.mubr.f32.gmra.mrb[0].mxu0 %v708
        %v776 = vpop.f32.mrb[0].mxu0
        %v777 = vadd.f32 0.0, %v776
        %v778 = vpop.f32.mrb[0].mxu0
        %779 = vdwg.mxu0
        %780 = vrot.lane.b32.xlu0 %v610, 112
        %v781 = vpop.permute.xlu0 %780
        %782 = vrot.lane.b32.xlu0 %v610, 80
        %v783 = vpop.permute.xlu0 %782
        %v784 = vsel %vm616, %v781, 0
        %v786 = vsel %vm616, %v783, 0
        %788 = vmatprep.subr.mxu0 0.0
        %789 = vmatpush1.xpose.msra.mxu0 %v786
        %790 = vmatprep.subr.mxu0 0.0
        %791 = vmatpush1.xpose.msra.mxu0 0.0
        %792 = vmatprep.subr.mxu0 0.0
        %793 = vmatpush1.xpose.msra.mxu0 0.0
        %794 = vmatprep.subr.mxu0 0.0
        %795 = vmatpush1.xpose.msra.mxu0 0.0
        %796 = vmatprep.subr.mxu0 0.0
        %797 = vmatpush1.xpose.msra.mxu0 0.0
        %798 = vmatprep.subr.mxu0 0.0
        %799 = vmatpush1.xpose.msra.mxu0 0.0
        %800 = vmatprep.subr.mxu0 0.0
        %801 = vmatpush1.xpose.msra.mxu0 0.0
        %802 = vmatprep.subr.mxu0 0.0
        %803 = vmatpush1.xpose.msra.mxu0 0.0
        %804 = vmatprep.subr.mxu0 0.0
        %805 = vmatpush1.xpose.msra.mxu0 0.0
        %806 = vmatprep.subr.mxu0 0.0
        %807 = vmatpush1.xpose.msra.mxu0 0.0
        %808 = vmatprep.subr.mxu0 0.0
        %809 = vmatpush1.xpose.msra.mxu0 0.0
        %810 = vmatprep.subr.mxu0 0.0
        %811 = vmatpush1.xpose.msra.mxu0 0.0
        %812 = vmatprep.subr.mxu0 0.0
        %813 = vmatpush1.xpose.msra.mxu0 0.0
        %814 = vmatprep.subr.mxu0 0.0
        %815 = vmatpush1.xpose.msra.mxu0 0.0
        %816 = vmatprep.subr.mxu0 0.0
        %817 = vmatpush1.xpose.msra.mxu0 0.0
        %818 = vmatprep.subr.mxu0 0.0
        %819 = vmatpush1.xpose.msra.mxu0 0.0
        %820 = vmatprep.subr.mxu0 0.0
        %821 = vmatpush1.xpose.msra.mxu0 0.0
        %822 = vmatprep.subr.mxu0 0.0
        %823 = vmatpush1.xpose.msra.mxu0 0.0
        %824 = vmatprep.subr.mxu0 0.0
        %825 = vmatpush1.xpose.msra.mxu0 0.0
        %826 = vmatprep.subr.mxu0 0.0
        %827 = vmatpush1.xpose.msra.mxu0 0.0
        %828 = vmatprep.subr.mxu0 0.0
        %829 = vmatpush1.xpose.msra.mxu0 0.0
        %830 = vmatprep.subr.mxu0 0.0
        %831 = vmatpush1.xpose.msra.mxu0 0.0
        %832 = vmatprep.subr.mxu0 0.0
        %833 = vmatpush1.xpose.msra.mxu0 0.0
        %834 = vmatprep.subr.mxu0 0.0
        %835 = vmatpush1.xpose.msra.mxu0 0.0
        %836 = vmatprep.subr.mxu0 0.0
        %837 = vmatpush1.xpose.msra.mxu0 0.0
        %838 = vmatprep.subr.mxu0 0.0
        %839 = vmatpush1.xpose.msra.mxu0 0.0
        %840 = vmatprep.subr.mxu0 0.0
        %841 = vmatpush1.xpose.msra.mxu0 0.0
        %842 = vmatprep.subr.mxu0 0.0
        %843 = vmatpush1.xpose.msra.mxu0 0.0
        %844 = vmatprep.subr.mxu0 0.0
        %845 = vmatpush1.xpose.msra.mxu0 0.0
        %846 = vmatprep.subr.mxu0 0.0
        %847 = vmatpush1.xpose.msra.mxu0 0.0
        %848 = vmatprep.subr.mxu0 0.0
        %849 = vmatpush1.xpose.msra.mxu0 0.0
        %850 = vmatprep.subr.mxu0 0.0
        %851 = vmatpush1.xpose.msra.mxu0 0.0
        %852 = vmatprep.mubr.f32.mxu0 0.0
        %853 = vmatmul.mubr.f32.gmra.mrb[0].mxu0 %v784
        %v854 = vpop.f32.mrb[0].mxu0
        %v855 = vadd.f32 0.0, %v854
        %v856 = vpop.f32.mrb[0].mxu0
        %857 = vdwg.mxu0
        %v858 = vsel %vm691, %v855, -inf
        %859 = vmax.xlane.f32.xlu0 %v858
        %v860 = vpop.xlane.xlu0 %859
        %v861 = vsub.f32 %v855, %v860
        %v862 = vmul.f32 %v861, 1.442695
        %v863 = vpow.pop %v862
        %v864 = vsel %vm691, %v863, 0.0
        %865 = vadd.xlane.f32.xlu0 %v864
        %v866 = vpop.xlane.xlu0 %865
        %v867 = vrcp.pop %v866
        %v868 = vmul.f32 %v863, %v867
        %s869 = scalar_lea.vmem %s437, 8 [#allocation7]
        %870 = vst.msk [vmem:[%s869] sm:$0xff] %vm691, %v868
        %871 = vrot.lane.b32.xlu0 %v610, 48
        %v872 = vpop.permute.xlu0 %871
        %v875 = vsel %vm691, %v868, 0
        %877 = vmatprep.subr.mxu0 0.0
        %878 = vmatpush1.msra.mxu0 %v872
        %879 = vmatprep.subr.mxu0 0.0
        %880 = vmatpush1.msra.mxu0 0.0
        %881 = vmatprep.subr.mxu0 0.0
        %882 = vmatpush1.msra.mxu0 0.0
        %883 = vmatprep.subr.mxu0 0.0
        %884 = vmatpush1.msra.mxu0 0.0
        %885 = vmatprep.subr.mxu0 0.0
        %886 = vmatpush1.msra.mxu0 0.0
        %887 = vmatprep.subr.mxu0 0.0
        %888 = vmatpush1.msra.mxu0 0.0
        %889 = vmatprep.subr.mxu0 0.0
        %890 = vmatpush1.msra.mxu0 0.0
        %891 = vmatprep.subr.mxu0 0.0
        %892 = vmatpush1.msra.mxu0 0.0
        %893 = vmatprep.subr.mxu0 0.0
        %894 = vmatpush1.msra.mxu0 0.0
        %895 = vmatprep.subr.mxu0 0.0
        %896 = vmatpush1.msra.mxu0 0.0
        %897 = vmatprep.subr.mxu0 0.0
        %898 = vmatpush1.msra.mxu0 0.0
        %899 = vmatprep.subr.mxu0 0.0
        %900 = vmatpush1.msra.mxu0 0.0
        %901 = vmatprep.subr.mxu0 0.0
        %902 = vmatpush1.msra.mxu0 0.0
        %903 = vmatprep.subr.mxu0 0.0
        %904 = vmatpush1.msra.mxu0 0.0
        %905 = vmatprep.subr.mxu0 0.0
        %906 = vmatpush1.msra.mxu0 0.0
        %907 = vmatprep.subr.mxu0 0.0
        %908 = vmatpush1.msra.mxu0 0.0
        %909 = vmatprep.subr.mxu0 0.0
        %910 = vmatpush1.msra.mxu0 0.0
        %911 = vmatprep.subr.mxu0 0.0
        %912 = vmatpush1.msra.mxu0 0.0
        %913 = vmatprep.subr.mxu0 0.0
        %914 = vmatpush1.msra.mxu0 0.0
        %915 = vmatprep.subr.mxu0 0.0
        %916 = vmatpush1.msra.mxu0 0.0
        %917 = vmatprep.subr.mxu0 0.0
        %918 = vmatpush1.msra.mxu0 0.0
        %919 = vmatprep.subr.mxu0 0.0
        %920 = vmatpush1.msra.mxu0 0.0
        %921 = vmatprep.subr.mxu0 0.0
        %922 = vmatpush1.msra.mxu0 0.0
        %923 = vmatprep.subr.mxu0 0.0
        %924 = vmatpush1.msra.mxu0 0.0
        %925 = vmatprep.subr.mxu0 0.0
        %926 = vmatpush1.msra.mxu0 0.0
        %927 = vmatprep.subr.mxu0 0.0
        %928 = vmatpush1.msra.mxu0 0.0
        %929 = vmatprep.subr.mxu0 0.0
        %930 = vmatpush1.msra.mxu0 0.0
        %931 = vmatprep.subr.mxu0 0.0
        %932 = vmatpush1.msra.mxu0 0.0
        %933 = vmatprep.subr.mxu0 0.0
        %934 = vmatpush1.msra.mxu0 0.0
        %935 = vmatprep.subr.mxu0 0.0
        %936 = vmatpush1.msra.mxu0 0.0
        %937 = vmatprep.subr.mxu0 0.0
        %938 = vmatpush1.msra.mxu0 0.0
        %939 = vmatprep.subr.mxu0 0.0
        %940 = vmatpush1.msra.mxu0 0.0
        %941 = vmatprep.mubr.f32.mxu0 0.0
        %942 = vmatmul.mubr.f32.gmra.mrb[0].mxu0 %v875
        %v943 = vpop.f32.mrb[0].mxu0
        %v944 = vadd.f32 0.0, %v943
        %v945 = vpop.f32.mrb[0].mxu0
        %946 = vdwg.mxu0
        %948 = vrot.lane.b32.xlu0 %v944, 16
        %v949 = vpop.permute.xlu0 %948
        %v951 = vsel %vm616, %v777, %v949
        %v952 = vld [vmem:[%s5] sm:$0xff]
        %v953 = vld [vmem:[%s5 + $0x8] sm:$0xff]
        %v954 = vld [vmem:[%s5 + $0x10] sm:$0xff]
        %v955 = vld [vmem:[%s5 + $0x18] sm:$0xff]
        %v956 = vld [vmem:[%s6] sm:$0x1]
        %v958 = vlaneseq
        %v959 = vshrl.u32 %v958, 7
        %v960 = vsub.s32 0, %v959
        %v961 = vrot.slane %v956, %v960
        %v964 = vsel %vm539, %v951, 0
        %966 = vmatprep.subr.mxu0 0.0
        %967 = vmatpush1.msra.mxu0 %v952
        %968 = vmatprep.subr.mxu0 0.0
        %969 = vmatpush1.msra.mxu0 %v953
        %970 = vmatprep.subr.mxu0 0.0
        %971 = vmatpush1.msra.mxu0 %v954
        %972 = vmatprep.subr.mxu0 0.0
        %973 = vmatpush1.msra.mxu0 %v955
        %974 = vmatprep.subr.mxu0 0.0
        %975 = vmatpush1.msra.mxu0 0.0
        %976 = vmatprep.subr.mxu0 0.0
        %977 = vmatpush1.msra.mxu0 0.0
        %978 = vmatprep.subr.mxu0 0.0
        %979 = vmatpush1.msra.mxu0 0.0
        %980 = vmatprep.subr.mxu0 0.0
        %981 = vmatpush1.msra.mxu0 0.0
        %982 = vmatprep.subr.mxu0 0.0
        %983 = vmatpush1.msra.mxu0 0.0
        %984 = vmatprep.subr.mxu0 0.0
        %985 = vmatpush1.msra.mxu0 0.0
        %986 = vmatprep.subr.mxu0 0.0
        %987 = vmatpush1.msra.mxu0 0.0
        %988 = vmatprep.subr.mxu0 0.0
        %989 = vmatpush1.msra.mxu0 0.0
        %990 = vmatprep.subr.mxu0 0.0
        %991 = vmatpush1.msra.mxu0 0.0
        %992 = vmatprep.subr.mxu0 0.0
        %993 = vmatpush1.msra.mxu0 0.0
        %994 = vmatprep.subr.mxu0 0.0
        %995 = vmatpush1.msra.mxu0 0.0
        %996 = vmatprep.subr.mxu0 0.0
        %997 = vmatpush1.msra.mxu0 0.0
        %998 = vmatprep.subr.mxu0 0.0
        %999 = vmatpush1.msra.mxu0 0.0
        %1000 = vmatprep.subr.mxu0 0.0
        %1001 = vmatpush1.msra.mxu0 0.0
        %1002 = vmatprep.subr.mxu0 0.0
        %1003 = vmatpush1.msra.mxu0 0.0
        %1004 = vmatprep.subr.mxu0 0.0
        %1005 = vmatpush1.msra.mxu0 0.0
        %1006 = vmatprep.subr.mxu0 0.0
        %1007 = vmatpush1.msra.mxu0 0.0
        %1008 = vmatprep.subr.mxu0 0.0
        %1009 = vmatpush1.msra.mxu0 0.0
        %1010 = vmatprep.subr.mxu0 0.0
        %1011 = vmatpush1.msra.mxu0 0.0
        %1012 = vmatprep.subr.mxu0 0.0
        %1013 = vmatpush1.msra.mxu0 0.0
        %1014 = vmatprep.subr.mxu0 0.0
        %1015 = vmatpush1.msra.mxu0 0.0
        %1016 = vmatprep.subr.mxu0 0.0
        %1017 = vmatpush1.msra.mxu0 0.0
        %1018 = vmatprep.subr.mxu0 0.0
        %1019 = vmatpush1.msra.mxu0 0.0
        %1020 = vmatprep.subr.mxu0 0.0
        %1021 = vmatpush1.msra.mxu0 0.0
        %1022 = vmatprep.subr.mxu0 0.0
        %1023 = vmatpush1.msra.mxu0 0.0
        %1024 = vmatprep.subr.mxu0 0.0
        %1025 = vmatpush1.msra.mxu0 0.0
        %1026 = vmatprep.subr.mxu0 0.0
        %1027 = vmatpush1.msra.mxu0 0.0
        %1028 = vmatprep.subr.mxu0 0.0
        %1029 = vmatpush1.msra.mxu0 0.0
        %1030 = vmatprep.mubr.f32.mxu0 0.0
        %1031 = vmatmul.mubr.f32.gmra.mrb[0].mxu0 %v964
        %v1032 = vpop.f32.mrb[0].mxu0
        %v1033 = vadd.f32 %v961, %v1032
        %v1034 = vpop.f32.mrb[0].mxu0
        %1035 = vdwg.mxu0
        %v1036 = vadd.f32 %v1033, %v534
        %v1037 = vsel %vm539, %v1036, 0.0
        %1038 = vadd.xlane.f32.xlu0 %v1037
        %v1039 = vpop.xlane.xlu0 %1038
        %v1040 = vrcp.pop 32.0
        %v1041 = vmul.f32 %v1039, %v1040
        %v1042 = vsub.f32 %v1036, %v1041
        %v1043 = vmul.f32 %v1042, %v1042
        %v1044 = vsel %vm539, %v1043, 0.0
        %1045 = vadd.xlane.f32.xlu0 %v1044
        %v1046 = vpop.xlane.xlu0 %1045
        %v1047 = vmul.f32 %v1046, %v1040
        %v1048 = vadd.f32 %v1047, 1e-05
        %v1049 = vrsqrt.pop %v1048
        %v1050 = vmul.f32 %v1042, %v1049
        %v1051 = vld [vmem:[%s7] sm:$0x1]
        %v1053 = vlaneseq
        %v1054 = vshrl.u32 %v1053, 7
        %v1055 = vsub.s32 0, %v1054
        %v1056 = vrot.slane %v1051, %v1055
        %v1058 = vmul.f32 %v1050, %v1056
        %v1059 = vld [vmem:[%s8] sm:$0x1]
        %v1061 = vlaneseq
        %v1062 = vshrl.u32 %v1061, 7
        %v1063 = vsub.s32 0, %v1062
        %v1064 = vrot.slane %v1059, %v1063
        %v1066 = vadd.f32 %v1058, %v1064
        %v1067 = vld [vmem:[%s9] sm:$0xff]
        %v1068 = vld [vmem:[%s9 + $0x8] sm:$0xff]
        %v1069 = vld [vmem:[%s9 + $0x10] sm:$0xff]
        %v1070 = vld [vmem:[%s9 + $0x18] sm:$0xff]
        %v1071 = vld [vmem:[%s10] sm:$0x1]
        %v1073 = vlaneseq
        %v1074 = vshrl.u32 %v1073, 7
        %v1075 = vsub.s32 0, %v1074
        %v1076 = vrot.slane %v1071, %v1075
        %v1079 = vsel %vm539, %v1066, 0
        %1081 = vmatprep.subr.mxu0 0.0
        %1082 = vmatpush1.msra.mxu0 %v1067
        %1083 = vmatprep.subr.mxu0 0.0
        %1084 = vmatpush1.msra.mxu0 %v1068
        %1085 = vmatprep.subr.mxu0 0.0
        %1086 = vmatpush1.msra.mxu0 %v1069
        %1087 = vmatprep.subr.mxu0 0.0
        %1088 = vmatpush1.msra.mxu0 %v1070
        %1089 = vmatprep.subr.mxu0 0.0
        %1090 = vmatpush1.msra.mxu0 0.0
        %1091 = vmatprep.subr.mxu0 0.0
        %1092 = vmatpush1.msra.mxu0 0.0
        %1093 = vmatprep.subr.mxu0 0.0
        %1094 = vmatpush1.msra.mxu0 0.0
        %1095 = vmatprep.subr.mxu0 0.0
        %1096 = vmatpush1.msra.mxu0 0.0
        %1097 = vmatprep.subr.mxu0 0.0
        %1098 = vmatpush1.msra.mxu0 0.0
        %1099 = vmatprep.subr.mxu0 0.0
        %1100 = vmatpush1.msra.mxu0 0.0
        %1101 = vmatprep.subr.mxu0 0.0
        %1102 = vmatpush1.msra.mxu0 0.0
        %1103 = vmatprep.subr.mxu0 0.0
        %1104 = vmatpush1.msra.mxu0 0.0
        %1105 = vmatprep.subr.mxu0 0.0
        %1106 = vmatpush1.msra.mxu0 0.0
        %1107 = vmatprep.subr.mxu0 0.0
        %1108 = vmatpush1.msra.mxu0 0.0
        %1109 = vmatprep.subr.mxu0 0.0
        %1110 = vmatpush1.msra.mxu0 0.0
        %1111 = vmatprep.subr.mxu0 0.0
        %1112 = vmatpush1.msra.mxu0 0.0
        %1113 = vmatprep.subr.mxu0 0.0
        %1114 = vmatpush1.msra.mxu0 0.0
        %1115 = vmatprep.subr.mxu0 0.0
        %1116 = vmatpush1.msra.mxu0 0.0
        %1117 = vmatprep.subr.mxu0 0.0
        %1118 = vmatpush1.msra.mxu0 0.0
        %1119 = vmatprep.subr.mxu0 0.0
        %1120 = vmatpush1.msra.mxu0 0.0
        %1121 = vmatprep.subr.mxu0 0.0
        %1122 = vmatpush1.msra.mxu0 0.0
        %1123 = vmatprep.subr.mxu0 0.0
        %1124 = vmatpush1.msra.mxu0 0.0
        %1125 = vmatprep.subr.mxu0 0.0
        %1126 = vmatpush1.msra.mxu0 0.0
        %1127 = vmatprep.subr.mxu0 0.0
        %1128 = vmatpush1.msra.mxu0 0.0
        %1129 = vmatprep.subr.mxu0 0.0
        %1130 = vmatpush1.msra.mxu0 0.0
        %1131 = vmatprep.subr.mxu0 0.0
        %1132 = vmatpush1.msra.mxu0 0.0
        %1133 = vmatprep.subr.mxu0 0.0
        %1134 = vmatpush1.msra.mxu0 0.0
        %1135 = vmatprep.subr.mxu0 0.0
        %1136 = vmatpush1.msra.mxu0 0.0
        %1137 = vmatprep.subr.mxu0 0.0
        %1138 = vmatpush1.msra.mxu0 0.0
        %1139 = vmatprep.subr.mxu0 0.0
        %1140 = vmatpush1.msra.mxu0 0.0
        %1141 = vmatprep.subr.mxu0 0.0
        %1142 = vmatpush1.msra.mxu0 0.0
        %1143 = vmatprep.subr.mxu0 0.0
        %1144 = vmatpush1.msra.mxu0 0.0
        %1145 = vmatprep.mubr.f32.mxu0 0.0
        %1146 = vmatmul.mubr.f32.gmra.mrb[0].mxu0 %v1079
        %v1147 = vpop.f32.mrb[0].mxu0
        %v1148 = vadd.f32 %v1076, %v1147
        %v1149 = vpop.f32.mrb[0].mxu0
        %1150 = vdwg.mxu0
        %1151 = vst.msk [vmem:[%s445] sm:$0xff] %vm455, %v1148
        %p1152 = scmp.lt.s32.totalorder %s29, 1
        %s1153 = scalar_select %p1152, %s29, 1
        %s1154 = smul.addr %s1153, 8
        %s1155 = scalar_lea.vmem %s11, %s1154
        %s1156 = sand.u32 %s299, 1
        %s1157 = scalar_lea.sflag [#allocation4], %s1156
        %s1158 = sand.u32 %s299, 1
        %s1159 = smul.addr %s1158, 16
        %s1160 = scalar_lea.vmem [#allocation7], %s1159
        // Predicated region
        $region73: #{tpu_custom_call.1} parent=63 // pred_check
          %p1161 = pneg %p283
        $region74: #{tpu_custom_call.1} parent=63 // pred_check_branch
          %1163 = sbr.rel (%p1161) target = $region76
        $region75: #{tpu_custom_call.1} parent=63 // pred_region
          _
        $region76: #{tpu_custom_call.1} parent=63 // pred_fallthru
          _
        // Predicated region
        $region77: #{tpu_custom_call.1} parent=63 // pred_check
          %p1164 = pneg %p309
        $region78: #{tpu_custom_call.1} parent=63 // pred_check_branch
          %1166 = sbr.rel (%p1164) target = $region80
        $region79: #{tpu_custom_call.1} parent=63 // pred_region
          %s1168 = ssub.s32 256, 256
          %1169 = vsyncadd %s1157, %s1168
          %s1170 = smul.addr %s29, 2
          %s1171 = smul.addr %s1170, 128
          %s1172 = scalar_lea.hbm %s12, %s1171
          %s1173 = sshll.u32 %s1160, 4
          %s1174 = int_to_ptr.vmem [resolvable:$true] %s1173
          %1179 = dma.vmem_to_hbm [thread:$0]  %s1174, 256, %s1172, %s1157, 128, 128, 8
        $region80: #{tpu_custom_call.1} parent=63 // pred_fallthru
          _
      $region64: #{tpu_custom_call.1} parent=5 // pred_fallthru
        _
      %p1180 = scmp.le.s32.totalorder 2, %s24
      // Predicated region
      $region81: #{tpu_custom_call.1} parent=5 // pred_check
        %p1181 = pneg %p1180
      $region82: #{tpu_custom_call.1} parent=5 // pred_check_branch
        %1183 = sbr.rel (%p1181) target = $region84
      $region83: #{tpu_custom_call.1} parent=5 // pred_region
        %s1184 = ssub.s32 %s24, 2
        // Predicated region
        $region85: #{tpu_custom_call.1} parent=83 // pred_check
          %p1185 = pneg %p289
        $region86: #{tpu_custom_call.1} parent=83 // pred_check_branch
          %1187 = sbr.rel (%p1185) target = $region88
        $region87: #{tpu_custom_call.1} parent=83 // pred_region
          %p1188 = scmp.lt.s32.totalorder %s30, 1
          %s1189 = scalar_select %p1188, %s30, 1
          %s1190 = smul.addr %s1189, 8
          %s1191 = scalar_lea.vmem %s11, %s1190
        $region88: #{tpu_custom_call.1} parent=83 // pred_fallthru
          _
        // Predicated region
        $region89: #{tpu_custom_call.1} parent=83 // pred_check
          %p1192 = pneg %p315
        $region90: #{tpu_custom_call.1} parent=83 // pred_check_branch
          %1194 = sbr.rel (%p1192) target = $region92
        $region91: #{tpu_custom_call.1} parent=83 // pred_region
          %s1195 = sand.u32 %s300, 1
          %s1196 = scalar_lea.sflag [#allocation4], %s1195
          %s1197 = sand.u32 %s300, 1
          %s1198 = smul.addr %s1197, 16
          %s1199 = scalar_lea.vmem [#allocation7], %s1198
          %1200 = dma.done %s1196, 256
        $region92: #{tpu_custom_call.1} parent=83 // pred_fallthru
          _
      $region84: #{tpu_custom_call.1} parent=5 // pred_fallthru
        _
    $region6: #{tpu_custom_call.1} parent=1 // loop_footer
      %s28 = sadd.s32 1, %s24
    $region7: #{tpu_custom_call.1} parent=1 // loop_footer_branch
      %23 = sbr.rel target = $region3
    $region8: #{tpu_custom_call.1} parent=1 // loop_exit
      _
    %1201 = vsyncpa [#allocation3], 1
    %s1202 = scalar_lea.sflag [#allocation3], 1
    %1203 = vsyncpa %s1202, 1
    %1204 = vsyncpa [#allocation6], 1
    %1205 = vsyncpa [#allocation4], 1
    %s1206 = scalar_lea.sflag [#allocation4], 1
    %1207 = vsyncpa %s1206, 1

</llo_original>
